<compile_context>
chip_gen: v7x
topology: tpu7x:2x2x1
jax: 0.10.0
libtpu: 0.0.40
codegen_flags: <defaults>
</compile_context>

<pallas_src>
import jax
import jax.numpy as jnp
from jax.experimental import pallas as pl
from jax.experimental.pallas import tpu as pltpu


def _leaky_relu(x, slope=0.2):
    # Valid for slope in (0, 1): max(x, slope*x) == leaky_relu(x, slope).
    return jnp.maximum(x, slope * x)


def discriminator_kernel(x_ref,
                         w1_ref, b1_ref,
                         w2_ref, b2_ref,
                         w3_ref, b3_ref,
                         w4_ref, b4_ref,
                         out_ref):
    # fc1 + leaky_relu(0.2) -- bf16 operands, f32 accumulation on the MXU.
    x = x_ref[...].astype(jnp.bfloat16)
    h = jnp.dot(x, w1_ref[...], preferred_element_type=jnp.float32) + b1_ref[...]
    h = _leaky_relu(h)
    # dropout -> identity (eval mode)

    # fc2 + leaky_relu(0.2)
    h = jnp.dot(h.astype(jnp.bfloat16), w2_ref[...],
                preferred_element_type=jnp.float32) + b2_ref[...]
    h = _leaky_relu(h)

    # fc3 + leaky_relu(0.2)
    h = jnp.dot(h.astype(jnp.bfloat16), w3_ref[...],
                preferred_element_type=jnp.float32) + b3_ref[...]
    h = _leaky_relu(h)

    # fc4: output_size == 1 -> avoid an N=1 MXU matmul; w4 is stored as
    # (1, hidden) so this is a broadcasted multiply + cross-lane row sum.
    w4 = w4_ref[...].astype(jnp.float32)                       # (1, hidden)
    out = jnp.sum(h * w4, axis=-1, keepdims=True) + b4_ref[...]  # (TB, 1)
    out_ref[...] = out.astype(out_ref.dtype)


def _round_up(n, m):
    return ((n + m - 1) // m) * m


def discriminator_forward(x, params, *, block_b=256):
    """x: (B, 784) float32; params from init_params (bf16 weights, f32 biases)."""
    B, K = x.shape
    w1, b1 = params["w1"], params["b1"]
    w2, b2 = params["w2"], params["b2"]
    w3, b3 = params["w3"], params["b3"]
    w4, b4 = params["w4"], params["b4"]

    d1, d2, d3 = w1.shape[1], w2.shape[1], w3.shape[1]
    out_dim = b4.shape[1]

    # Pad K (784 -> 896) to a lane multiple and B up to a multiple of block_b.
    k_pad = _round_up(K, 128)
    b_pad = _round_up(max(B, block_b), block_b)
    x_p = jnp.pad(x, ((0, b_pad - B), (0, k_pad - K)))
    w1_p = jnp.pad(w1, ((0, k_pad - K), (0, 0)))

    grid = (b_pad // block_b,)

    def tile_batch(i):
        return (i, 0)

    def resident(i):  # weights/biases: same block every step -> VMEM-resident
        return (0, 0)

    flops = 2 * b_pad * (k_pad * d1 + d1 * d2 + d2 * d3 + d3 * out_dim)
    bytes_accessed = (
        x_p.size * x_p.dtype.itemsize
        + sum(a.size * a.dtype.itemsize
              for a in (w1_p, b1, w2, b2, w3, b3, w4, b4))
        + b_pad * out_dim * 4)

    out = pl.pallas_call(
        discriminator_kernel,
        out_shape=jax.ShapeDtypeStruct((b_pad, out_dim), jnp.float32),
        grid=grid,
        in_specs=[
            pl.BlockSpec((block_b, k_pad), tile_batch),   # x tile
            pl.BlockSpec((k_pad, d1), resident),          # w1
            pl.BlockSpec((1, d1), resident),              # b1
            pl.BlockSpec((d1, d2), resident),             # w2
            pl.BlockSpec((1, d2), resident),              # b2
            pl.BlockSpec((d2, d3), resident),             # w3
            pl.BlockSpec((1, d3), resident),              # b3
            pl.BlockSpec((1, d3), resident),              # w4 stored (1, hidden)
            pl.BlockSpec((1, out_dim), resident),         # b4
        ],
        out_specs=pl.BlockSpec((block_b, out_dim), tile_batch),
        compiler_params=pltpu.CompilerParams(
            dimension_semantics=("parallel",)),
        cost_estimate=pl.CostEstimate(
            flops=flops, transcendentals=0, bytes_accessed=bytes_accessed),
    )(x_p, w1_p, b1, w2, b2, w3, b3, w4, b4)

    return out[:B]


def init_params(key, input_size, hidden_dim, output_size):
    """Deterministic PyTorch-style init.

    w1..w3: (in, out) bf16; w4: (1, hidden) bf16 (transposed for the VPU
    reduction in the kernel, output_size must be 1); biases: (1, out) f32.
    """
    assert output_size == 1, "fc4 path in the kernel specializes to output_size == 1"
    dims = [(input_size, 4 * hidden_dim),
            (4 * hidden_dim, 2 * hidden_dim),
            (2 * hidden_dim, hidden_dim),
            (hidden_dim, output_size)]
    params = {}
    for i, (din, dout) in enumerate(dims, start=1):
        key, kw, kb = jax.random.split(key, 3)
        bound = 1.0 / (din ** 0.5)  # nn.Linear default U(-1/sqrt(in), 1/sqrt(in))
        w = jax.random.uniform(kw, (din, dout), jnp.float32, -bound, bound)
        b = jax.random.uniform(kb, (1, dout), jnp.float32, -bound, bound)
        if i == 4:
            w = w.T                                   # (1, hidden)
        params[f"w{i}"] = w.astype(jnp.bfloat16)      # bf16 weight storage
        params[f"b{i}"] = b                           # f32 biases
    return params


def reference_forward(x, params):
    """Pure-JAX fp32 reference (weights dequantized from bf16)."""
    h = x.reshape(-1, 28 * 28)
    w1 = params["w1"].astype(jnp.float32)
    w2 = params["w2"].astype(jnp.float32)
    w3 = params["w3"].astype(jnp.float32)
    w4 = params["w4"].astype(jnp.float32)            # (1, hidden)
    h = jax.nn.leaky_relu(h @ w1 + params["b1"], 0.2)
    h = jax.nn.leaky_relu(h @ w2 + params["b2"], 0.2)
    h = jax.nn.leaky_relu(h @ w3 + params["b3"], 0.2)
    return h @ w4.T + params["b4"]


if __name__ == "__main__":
    input_size = 784          # 28*28, hardcoded by the forward's view(-1, 28*28)
    hidden_dim = 32
    output_size = 1

    key = jax.random.PRNGKey(0)
    key, kp = jax.random.split(key)
    params = init_params(kp, input_size, hidden_dim, output_size)

    # Small smoke test (batch=8, padded to one 256-row tile) and a ragged
    # multi-tile case (batch=300 -> grid of 2 batch tiles).
    for batch in (8, 300):
        key, kx = jax.random.split(key)
        # Emulate an image input that gets flattened: (B, 1, 28, 28).
        x_img = jax.random.normal(kx, (batch, 1, 28, 28), jnp.float32)
        x = x_img.reshape(-1, 28 * 28)   # the module's view(-1, 28*28), plain JAX

        out = jax.block_until_ready(discriminator_forward(x, params))
        ref = reference_forward(x_img, params)

        assert out.shape == (batch, output_size), out.shape
        # bf16 operands inside the kernel vs fp32 reference -> loose tolerance.
        assert jnp.allclose(out, ref, atol=5e-2, rtol=5e-2), \
            float(jnp.max(jnp.abs(out - ref)))

    print("KERNEL_OK")
</pallas_src>

<mosaic_0001>
module attributes {stable_mosaic.version = 11 : i64} {
  func.func @discriminator_kernel(%arg0: i32, %arg1: memref<256x896xf32, #tpu.memory_space<vmem>>, %arg2: memref<896x128xbf16, #tpu.memory_space<vmem>>, %arg3: memref<1x128xf32, #tpu.memory_space<vmem>>, %arg4: memref<128x64xbf16, #tpu.memory_space<vmem>>, %arg5: memref<1x64xf32, #tpu.memory_space<vmem>>, %arg6: memref<64x32xbf16, #tpu.memory_space<vmem>>, %arg7: memref<1x32xf32, #tpu.memory_space<vmem>>, %arg8: memref<1x32xbf16, #tpu.memory_space<vmem>>, %arg9: memref<1x1xf32, #tpu.memory_space<vmem>>, %arg10: memref<256x1xf32, #tpu.memory_space<vmem>>) attributes {dimension_semantics = [#tpu.dimension_semantics<parallel>], iteration_bounds = array<i64: 1>, scalar_prefetch = 0 : i64, scratch_operands = 0 : i64, tpu.core_type = #tpu.core_type<tc>, window_params = [{transform_indices = @transform_0, window_bounds = array<i64: 256, 896>}, {pipeline_mode = #tpu.pipeline_mode<synchronous>, transform_indices = @transform_1, window_bounds = array<i64: 896, 128>}, {pipeline_mode = #tpu.pipeline_mode<synchronous>, transform_indices = @transform_2, window_bounds = array<i64: 1, 128>}, {pipeline_mode = #tpu.pipeline_mode<synchronous>, transform_indices = @transform_3, window_bounds = array<i64: 128, 64>}, {pipeline_mode = #tpu.pipeline_mode<synchronous>, transform_indices = @transform_4, window_bounds = array<i64: 1, 64>}, {pipeline_mode = #tpu.pipeline_mode<synchronous>, transform_indices = @transform_5, window_bounds = array<i64: 64, 32>}, {pipeline_mode = #tpu.pipeline_mode<synchronous>, transform_indices = @transform_6, window_bounds = array<i64: 1, 32>}, {pipeline_mode = #tpu.pipeline_mode<synchronous>, transform_indices = @transform_7, window_bounds = array<i64: 1, 32>}, {pipeline_mode = #tpu.pipeline_mode<synchronous>, transform_indices = @transform_8, window_bounds = array<i64: 1, 1>}, {transform_indices = @transform_9, window_bounds = array<i64: 256, 1>}]} {
    %c0 = arith.constant 0 : index
    %c0_0 = arith.constant 0 : index
    %0 = vector.load %arg1[%c0, %c0_0] : memref<256x896xf32, #tpu.memory_space<vmem>>, vector<256x896xf32>
    %1 = arith.truncf %0 : vector<256x896xf32> to vector<256x896xbf16>
    %c0_1 = arith.constant 0 : index
    %c0_2 = arith.constant 0 : index
    %2 = vector.load %arg2[%c0_1, %c0_2] : memref<896x128xbf16, #tpu.memory_space<vmem>>, vector<896x128xbf16>
    %cst = arith.constant dense<0.000000e+00> : vector<256x128xf32>
    %3 = tpu.matmul %1, %2, %cst {dimension_numbers = #tpu.dot_dimension_numbers<[1], [0], [0], [1], [0, 0, 1, 1], [], []>} : vector<256x896xbf16>, vector<896x128xbf16>, vector<256x128xf32> -> vector<256x128xf32>
    %c0_3 = arith.constant 0 : index
    %c0_4 = arith.constant 0 : index
    %4 = vector.load %arg3[%c0_3, %c0_4] : memref<1x128xf32, #tpu.memory_space<vmem>>, vector<1x128xf32>
    %5 = vector.broadcast %4 : vector<1x128xf32> to vector<256x128xf32>
    %6 = arith.addf %3, %5 : vector<256x128xf32>
    %cst_5 = arith.constant 2.000000e-01 : f32
    %7 = vector.broadcast %cst_5 : f32 to vector<256x128xf32>
    %8 = arith.mulf %7, %6 : vector<256x128xf32>
    %9 = arith.maximumf %6, %8 : vector<256x128xf32>
    %10 = arith.truncf %9 : vector<256x128xf32> to vector<256x128xbf16>
    %c0_6 = arith.constant 0 : index
    %c0_7 = arith.constant 0 : index
    %11 = vector.load %arg4[%c0_6, %c0_7] : memref<128x64xbf16, #tpu.memory_space<vmem>>, vector<128x64xbf16>
    %cst_8 = arith.constant dense<0.000000e+00> : vector<256x64xf32>
    %12 = tpu.matmul %10, %11, %cst_8 {dimension_numbers = #tpu.dot_dimension_numbers<[1], [0], [0], [1], [0, 0, 1, 1], [], []>} : vector<256x128xbf16>, vector<128x64xbf16>, vector<256x64xf32> -> vector<256x64xf32>
    %c0_9 = arith.constant 0 : index
    %c0_10 = arith.constant 0 : index
    %13 = vector.load %arg5[%c0_9, %c0_10] : memref<1x64xf32, #tpu.memory_space<vmem>>, vector<1x64xf32>
    %14 = vector.broadcast %13 : vector<1x64xf32> to vector<256x64xf32>
    %15 = arith.addf %12, %14 : vector<256x64xf32>
    %cst_11 = arith.constant 2.000000e-01 : f32
    %16 = vector.broadcast %cst_11 : f32 to vector<256x64xf32>
    %17 = arith.mulf %16, %15 : vector<256x64xf32>
    %18 = arith.maximumf %15, %17 : vector<256x64xf32>
    %19 = arith.truncf %18 : vector<256x64xf32> to vector<256x64xbf16>
    %c0_12 = arith.constant 0 : index
    %c0_13 = arith.constant 0 : index
    %20 = vector.load %arg6[%c0_12, %c0_13] : memref<64x32xbf16, #tpu.memory_space<vmem>>, vector<64x32xbf16>
    %cst_14 = arith.constant dense<0.000000e+00> : vector<256x32xf32>
    %21 = tpu.matmul %19, %20, %cst_14 {dimension_numbers = #tpu.dot_dimension_numbers<[1], [0], [0], [1], [0, 0, 1, 1], [], []>} : vector<256x64xbf16>, vector<64x32xbf16>, vector<256x32xf32> -> vector<256x32xf32>
    %c0_15 = arith.constant 0 : index
    %c0_16 = arith.constant 0 : index
    %22 = vector.load %arg7[%c0_15, %c0_16] : memref<1x32xf32, #tpu.memory_space<vmem>>, vector<1x32xf32>
    %23 = vector.broadcast %22 : vector<1x32xf32> to vector<256x32xf32>
    %24 = arith.addf %21, %23 : vector<256x32xf32>
    %cst_17 = arith.constant 2.000000e-01 : f32
    %25 = vector.broadcast %cst_17 : f32 to vector<256x32xf32>
    %26 = arith.mulf %25, %24 : vector<256x32xf32>
    %27 = arith.maximumf %24, %26 : vector<256x32xf32>
    %c0_18 = arith.constant 0 : index
    %c0_19 = arith.constant 0 : index
    %28 = vector.load %arg8[%c0_18, %c0_19] : memref<1x32xbf16, #tpu.memory_space<vmem>>, vector<1x32xbf16>
    %29 = arith.extf %28 : vector<1x32xbf16> to vector<1x32xf32>
    %30 = vector.broadcast %29 : vector<1x32xf32> to vector<256x32xf32>
    %31 = arith.mulf %27, %30 : vector<256x32xf32>
    %cst_20 = arith.constant dense<0.000000e+00> : vector<256xf32>
    %32 = vector.multi_reduction <add>, %31, %cst_20 [1] : vector<256x32xf32> to vector<256xf32>
    %33 = vector.shape_cast %32 : vector<256xf32> to vector<256x1xf32>
    %c0_21 = arith.constant 0 : index
    %c0_22 = arith.constant 0 : index
    %34 = vector.load %arg9[%c0_21, %c0_22] : memref<1x1xf32, #tpu.memory_space<vmem>>, vector<1x1xf32>
    %35 = vector.broadcast %34 : vector<1x1xf32> to vector<256x1xf32>
    %36 = arith.addf %33, %35 : vector<256x1xf32>
    %c0_23 = arith.constant 0 : index
    %c0_24 = arith.constant 0 : index
    %37 = vector.load %arg10[%c0_23, %c0_24] : memref<256x1xf32, #tpu.memory_space<vmem>>, vector<256x1xf32>
    tpu.vector_store %arg10[%c0_23, %c0_24], %36 {strides = array<i32>} : memref<256x1xf32, #tpu.memory_space<vmem>>, vector<256x1xf32>,
    return
  }
  func.func @transform_0(%arg0: i32) -> (i32, i32) {
    %c0_i32 = arith.constant 0 : i32
    %c0_i32_0 = arith.constant 0 : i32
    return %arg0, %c0_i32 : i32, i32
  }
  func.func @transform_1(%arg0: i32) -> (i32, i32) {
    %c0_i32 = arith.constant 0 : i32
    %c0_i32_0 = arith.constant 0 : i32
    %c0_i32_1 = arith.constant 0 : i32
    return %c0_i32, %c0_i32_0 : i32, i32
  }
  func.func @transform_2(%arg0: i32) -> (i32, i32) {
    %c0_i32 = arith.constant 0 : i32
    %c0_i32_0 = arith.constant 0 : i32
    %c0_i32_1 = arith.constant 0 : i32
    return %c0_i32, %c0_i32_0 : i32, i32
  }
  func.func @transform_3(%arg0: i32) -> (i32, i32) {
    %c0_i32 = arith.constant 0 : i32
    %c0_i32_0 = arith.constant 0 : i32
    %c0_i32_1 = arith.constant 0 : i32
    return %c0_i32, %c0_i32_0 : i32, i32
  }
  func.func @transform_4(%arg0: i32) -> (i32, i32) {
    %c0_i32 = arith.constant 0 : i32
    %c0_i32_0 = arith.constant 0 : i32
    %c0_i32_1 = arith.constant 0 : i32
    return %c0_i32, %c0_i32_0 : i32, i32
  }
  func.func @transform_5(%arg0: i32) -> (i32, i32) {
    %c0_i32 = arith.constant 0 : i32
    %c0_i32_0 = arith.constant 0 : i32
    %c0_i32_1 = arith.constant 0 : i32
    return %c0_i32, %c0_i32_0 : i32, i32
  }
  func.func @transform_6(%arg0: i32) -> (i32, i32) {
    %c0_i32 = arith.constant 0 : i32
    %c0_i32_0 = arith.constant 0 : i32
    %c0_i32_1 = arith.constant 0 : i32
    return %c0_i32, %c0_i32_0 : i32, i32
  }
  func.func @transform_7(%arg0: i32) -> (i32, i32) {
    %c0_i32 = arith.constant 0 : i32
    %c0_i32_0 = arith.constant 0 : i32
    %c0_i32_1 = arith.constant 0 : i32
    return %c0_i32, %c0_i32_0 : i32, i32
  }
  func.func @transform_8(%arg0: i32) -> (i32, i32) {
    %c0_i32 = arith.constant 0 : i32
    %c0_i32_0 = arith.constant 0 : i32
    %c0_i32_1 = arith.constant 0 : i32
    return %c0_i32, %c0_i32_0 : i32, i32
  }
  func.func @transform_9(%arg0: i32) -> (i32, i32) {
    %c0_i32 = arith.constant 0 : i32
    %c0_i32_0 = arith.constant 0 : i32
    return %arg0, %c0_i32 : i32, i32
  }
}

</mosaic_0001>

<llo_original>
// kernel: tpu_custom_call.1
$region0: #{tpu_custom_call.1}
  #allocation0 [shape = 'u32[]', space=smem, size = 0x4, offset = 0x4, fixed_abs, tag = 'smem constant byte address 0x4 - core index']
  #allocation1 [shape = 'u32[144,128]{1,0:T(1,128)}', space=vmem, size = 0x12000, scoped, tag = 'internal scratch']
  #allocation2 [shape = 'f32[1,1]{1,0:T(1,128)S(1)}', space=vmem, size = 0x200, scoped, tag = 'scoped memory for tpu_custom_call.1']
  %s0 = inlined_call_operand.hbm [shape: f32[256,896], index: 0, kind: input, shape index: {}]
  %s1 = inlined_call_operand.hbm [shape: bf16[896,128], index: 1, kind: input, shape index: {}]
  %s2 = inlined_call_operand.vmem [shape: f32[1,128], index: 2, kind: input, shape index: {}]
  %s3 = inlined_call_operand.vmem [shape: bf16[128,64], index: 3, kind: input, shape index: {}]
  %s4 = inlined_call_operand.vmem [shape: f32[1,64], index: 4, kind: input, shape index: {}]
  %s5 = inlined_call_operand.vmem [shape: bf16[64,32], index: 5, kind: input, shape index: {}]
  %s6 = inlined_call_operand.vmem [shape: f32[1,32], index: 6, kind: input, shape index: {}]
  %s7 = inlined_call_operand.vmem [shape: bf16[1,32], index: 7, kind: input, shape index: {}]
  %s8 = inlined_call_operand.<no memory space> [shape: f32[1,1], index: 8, kind: input, shape index: {}]
  %s9 = inlined_call_operand.vmem [shape: f32[256,1], index: 9, kind: output, shape index: {}]
  %s10 = sld [smem:[#allocation0]]
  $region54: #{tpu_custom_call.1} parent=0
    _
  %s12 = ssub.s32 1, %s10
  %s13 = scalar_select 0, %s12, %s10
  %v14 = vstv %s8
  %15 = vst [vmem:[#allocation2] sm:$0x1] %v14
  $region1: #{tpu_custom_call.1} parent=0
    #allocation3 [shape = 'u8[917504]{0}', space=vmem, size = 0xe0000, scoped, tag = 'input window, operand 0, single buffered']
    #allocation4 [shape = 's32[1]{0}', space=sflag, size = 0x4, scoped, tag = 'scoped memory for tpu_custom_call.1']
    #allocation5 [shape = 'u8[229376]{0}', space=vmem, size = 0x38000, scoped, tag = 'input window, operand 1, single buffered']
    #allocation6 [shape = 's32[1]{0}', space=sflag, size = 0x4, scoped, tag = 'scoped memory for tpu_custom_call.1']
    %16 = vsyncpa [#allocation4], 0
    %17 = vsyncpa [#allocation6], 0
    // Predicated region
    $region2: #{tpu_custom_call.1} parent=1 // pred_check
      _
    $region3: #{tpu_custom_call.1} parent=1 // pred_check_branch
      %19 = sbr.rel (0) target = $region5
    $region4: #{tpu_custom_call.1} parent=1 // pred_region
      %s21 = ssub.s32 28672, 28672
      %22 = vsyncadd [#allocation4], %s21
      %s23 = sshll.u32 [#allocation3], 4
      %s24 = int_to_ptr.vmem [resolvable:$true] %s23
      %29 = dma.hbm_to_vmem [thread:$0]  %s0, 28672, %s24, [#allocation4], 896, 896, 56
    $region5: #{tpu_custom_call.1} parent=1 // pred_fallthru
      _
    // Predicated region
    $region6: #{tpu_custom_call.1} parent=1 // pred_check
      _
    $region7: #{tpu_custom_call.1} parent=1 // pred_check_branch
      %31 = sbr.rel (0) target = $region9
    $region8: #{tpu_custom_call.1} parent=1 // pred_region
      %s33 = ssub.s32 7168, 7168
      %34 = vsyncadd [#allocation6], %s33
      %s35 = sshll.u32 [#allocation5], 4
      %s36 = int_to_ptr.vmem [resolvable:$true] %s35
      %41 = dma.hbm_to_vmem [thread:$0]  %s1, 7168, %s36, [#allocation6], 64, 64, 4
    $region9: #{tpu_custom_call.1} parent=1 // pred_fallthru
      _
    // Predicated region
    $region10: #{tpu_custom_call.1} parent=1 // pred_check
      _
    $region11: #{tpu_custom_call.1} parent=1 // pred_check_branch
      %43 = sbr.rel (0) target = $region13
    $region12: #{tpu_custom_call.1} parent=1 // pred_region
      _
    $region13: #{tpu_custom_call.1} parent=1 // pred_fallthru
      _
    // Predicated region
    $region14: #{tpu_custom_call.1} parent=1 // pred_check
      _
    $region15: #{tpu_custom_call.1} parent=1 // pred_check_branch
      %45 = sbr.rel (0) target = $region17
    $region16: #{tpu_custom_call.1} parent=1 // pred_region
      _
    $region17: #{tpu_custom_call.1} parent=1 // pred_fallthru
      _
    // Predicated region
    $region18: #{tpu_custom_call.1} parent=1 // pred_check
      _
    $region19: #{tpu_custom_call.1} parent=1 // pred_check_branch
      %47 = sbr.rel (0) target = $region21
    $region20: #{tpu_custom_call.1} parent=1 // pred_region
      _
    $region21: #{tpu_custom_call.1} parent=1 // pred_fallthru
      _
    // Predicated region
    $region22: #{tpu_custom_call.1} parent=1 // pred_check
      _
    $region23: #{tpu_custom_call.1} parent=1 // pred_check_branch
      %49 = sbr.rel (0) target = $region25
    $region24: #{tpu_custom_call.1} parent=1 // pred_region
      _
    $region25: #{tpu_custom_call.1} parent=1 // pred_fallthru
      _
    // Predicated region
    $region26: #{tpu_custom_call.1} parent=1 // pred_check
      _
    $region27: #{tpu_custom_call.1} parent=1 // pred_check_branch
      %51 = sbr.rel (0) target = $region29
    $region28: #{tpu_custom_call.1} parent=1 // pred_region
      _
    $region29: #{tpu_custom_call.1} parent=1 // pred_fallthru
      _
    // Predicated region
    $region30: #{tpu_custom_call.1} parent=1 // pred_check
      _
    $region31: #{tpu_custom_call.1} parent=1 // pred_check_branch
      %53 = sbr.rel (0) target = $region33
    $region32: #{tpu_custom_call.1} parent=1 // pred_region
      _
    $region33: #{tpu_custom_call.1} parent=1 // pred_fallthru
      _
    // Predicated region
    $region34: #{tpu_custom_call.1} parent=1 // pred_check
      _
    $region35: #{tpu_custom_call.1} parent=1 // pred_check_branch
      %55 = sbr.rel (0) target = $region37
    $region36: #{tpu_custom_call.1} parent=1 // pred_region
      _
    $region37: #{tpu_custom_call.1} parent=1 // pred_fallthru
      _
    // Predicated region
    $region38: #{tpu_custom_call.1} parent=1 // pred_check
      _
    $region39: #{tpu_custom_call.1} parent=1 // pred_check_branch
      %57 = sbr.rel (0) target = $region41
    $region40: #{tpu_custom_call.1} parent=1 // pred_region
      %58 = dma.done [#allocation4], 28672
    $region41: #{tpu_custom_call.1} parent=1 // pred_fallthru
      _
    // Predicated region
    $region42: #{tpu_custom_call.1} parent=1 // pred_check
      _
    $region43: #{tpu_custom_call.1} parent=1 // pred_check_branch
      %60 = sbr.rel (0) target = $region45
    $region44: #{tpu_custom_call.1} parent=1 // pred_region
      %61 = dma.done [#allocation6], 7168
    $region45: #{tpu_custom_call.1} parent=1 // pred_fallthru
      _
    %v63 = vld [vmem:[#allocation3] sm:$0xff]
    %v64 = vld [vmem:[#allocation3 + $0x8] sm:$0xff]
    %v65 = vld [vmem:[#allocation3 + $0x10] sm:$0xff]
    %v66 = vld [vmem:[#allocation3 + $0x18] sm:$0xff]
    %v67 = vld [vmem:[#allocation3 + $0x20] sm:$0xff]
    %v68 = vld [vmem:[#allocation3 + $0x28] sm:$0xff]
    %v69 = vld [vmem:[#allocation3 + $0x30] sm:$0xff]
    %v70 = vld [vmem:[#allocation3 + $0x38] sm:$0xff]
    %v71 = vld [vmem:[#allocation3 + $0x40] sm:$0xff]
    %v72 = vld [vmem:[#allocation3 + $0x48] sm:$0xff]
    %v73 = vld [vmem:[#allocation3 + $0x50] sm:$0xff]
    %v74 = vld [vmem:[#allocation3 + $0x58] sm:$0xff]
    %v75 = vld [vmem:[#allocation3 + $0x60] sm:$0xff]
    %v76 = vld [vmem:[#allocation3 + $0x68] sm:$0xff]
    %v77 = vld [vmem:[#allocation3 + $0x70] sm:$0xff]
    %v78 = vld [vmem:[#allocation3 + $0x78] sm:$0xff]
    %v79 = vld [vmem:[#allocation3 + $0x80] sm:$0xff]
    %v80 = vld [vmem:[#allocation3 + $0x88] sm:$0xff]
    %v81 = vld [vmem:[#allocation3 + $0x90] sm:$0xff]
    %v82 = vld [vmem:[#allocation3 + $0x98] sm:$0xff]
    %v83 = vld [vmem:[#allocation3 + $0xa0] sm:$0xff]
    %v84 = vld [vmem:[#allocation3 + $0xa8] sm:$0xff]
    %v85 = vld [vmem:[#allocation3 + $0xb0] sm:$0xff]
    %v86 = vld [vmem:[#allocation3 + $0xb8] sm:$0xff]
    %v87 = vld [vmem:[#allocation3 + $0xc0] sm:$0xff]
    %v88 = vld [vmem:[#allocation3 + $0xc8] sm:$0xff]
    %v89 = vld [vmem:[#allocation3 + $0xd0] sm:$0xff]
    %v90 = vld [vmem:[#allocation3 + $0xd8] sm:$0xff]
    %v91 = vld [vmem:[#allocation3 + $0xe0] sm:$0xff]
    %v92 = vld [vmem:[#allocation3 + $0xe8] sm:$0xff]
    %v93 = vld [vmem:[#allocation3 + $0xf0] sm:$0xff]
    %v94 = vld [vmem:[#allocation3 + $0xf8] sm:$0xff]
    %v95 = vld [vmem:[#allocation3 + $0x100] sm:$0xff]
    %v96 = vld [vmem:[#allocation3 + $0x108] sm:$0xff]
    %v97 = vld [vmem:[#allocation3 + $0x110] sm:$0xff]
    %v98 = vld [vmem:[#allocation3 + $0x118] sm:$0xff]
    %v99 = vld [vmem:[#allocation3 + $0x120] sm:$0xff]
    %v100 = vld [vmem:[#allocation3 + $0x128] sm:$0xff]
    %v101 = vld [vmem:[#allocation3 + $0x130] sm:$0xff]
    %v102 = vld [vmem:[#allocation3 + $0x138] sm:$0xff]
    %v103 = vld [vmem:[#allocation3 + $0x140] sm:$0xff]
    %v104 = vld [vmem:[#allocation3 + $0x148] sm:$0xff]
    %v105 = vld [vmem:[#allocation3 + $0x150] sm:$0xff]
    %v106 = vld [vmem:[#allocation3 + $0x158] sm:$0xff]
    %v107 = vld [vmem:[#allocation3 + $0x160] sm:$0xff]
    %v108 = vld [vmem:[#allocation3 + $0x168] sm:$0xff]
    %v109 = vld [vmem:[#allocation3 + $0x170] sm:$0xff]
    %v110 = vld [vmem:[#allocation3 + $0x178] sm:$0xff]
    %v111 = vld [vmem:[#allocation3 + $0x180] sm:$0xff]
    %v112 = vld [vmem:[#allocation3 + $0x188] sm:$0xff]
    %v113 = vld [vmem:[#allocation3 + $0x190] sm:$0xff]
    %v114 = vld [vmem:[#allocation3 + $0x198] sm:$0xff]
    %v115 = vld [vmem:[#allocation3 + $0x1a0] sm:$0xff]
    %v116 = vld [vmem:[#allocation3 + $0x1a8] sm:$0xff]
    %v117 = vld [vmem:[#allocation3 + $0x1b0] sm:$0xff]
    %v118 = vld [vmem:[#allocation3 + $0x1b8] sm:$0xff]
    %v119 = vld [vmem:[#allocation3 + $0x1c0] sm:$0xff]
    %v120 = vld [vmem:[#allocation3 + $0x1c8] sm:$0xff]
    %v121 = vld [vmem:[#allocation3 + $0x1d0] sm:$0xff]
    %v122 = vld [vmem:[#allocation3 + $0x1d8] sm:$0xff]
    %v123 = vld [vmem:[#allocation3 + $0x1e0] sm:$0xff]
    %v124 = vld [vmem:[#allocation3 + $0x1e8] sm:$0xff]
    %v125 = vld [vmem:[#allocation3 + $0x1f0] sm:$0xff]
    %v126 = vld [vmem:[#allocation3 + $0x1f8] sm:$0xff]
    %v127 = vld [vmem:[#allocation3 + $0x200] sm:$0xff]
    %v128 = vld [vmem:[#allocation3 + $0x208] sm:$0xff]
    %v129 = vld [vmem:[#allocation3 + $0x210] sm:$0xff]
    %v130 = vld [vmem:[#allocation3 + $0x218] sm:$0xff]
    %v131 = vld [vmem:[#allocation3 + $0x220] sm:$0xff]
    %v132 = vld [vmem:[#allocation3 + $0x228] sm:$0xff]
    %v133 = vld [vmem:[#allocation3 + $0x230] sm:$0xff]
    %v134 = vld [vmem:[#allocation3 + $0x238] sm:$0xff]
    %v135 = vld [vmem:[#allocation3 + $0x240] sm:$0xff]
    %v136 = vld [vmem:[#allocation3 + $0x248] sm:$0xff]
    %v137 = vld [vmem:[#allocation3 + $0x250] sm:$0xff]
    %v138 = vld [vmem:[#allocation3 + $0x258] sm:$0xff]
    %v139 = vld [vmem:[#allocation3 + $0x260] sm:$0xff]
    %v140 = vld [vmem:[#allocation3 + $0x268] sm:$0xff]
    %v141 = vld [vmem:[#allocation3 + $0x270] sm:$0xff]
    %v142 = vld [vmem:[#allocation3 + $0x278] sm:$0xff]
    %v143 = vld [vmem:[#allocation3 + $0x280] sm:$0xff]
    %v144 = vld [vmem:[#allocation3 + $0x288] sm:$0xff]
    %v145 = vld [vmem:[#allocation3 + $0x290] sm:$0xff]
    %v146 = vld [vmem:[#allocation3 + $0x298] sm:$0xff]
    %v147 = vld [vmem:[#allocation3 + $0x2a0] sm:$0xff]
    %v148 = vld [vmem:[#allocation3 + $0x2a8] sm:$0xff]
    %v149 = vld [vmem:[#allocation3 + $0x2b0] sm:$0xff]
    %v150 = vld [vmem:[#allocation3 + $0x2b8] sm:$0xff]
    %v151 = vld [vmem:[#allocation3 + $0x2c0] sm:$0xff]
    %v152 = vld [vmem:[#allocation3 + $0x2c8] sm:$0xff]
    %v153 = vld [vmem:[#allocation3 + $0x2d0] sm:$0xff]
    %v154 = vld [vmem:[#allocation3 + $0x2d8] sm:$0xff]
    %v155 = vld [vmem:[#allocation3 + $0x2e0] sm:$0xff]
    %v156 = vld [vmem:[#allocation3 + $0x2e8] sm:$0xff]
    %v157 = vld [vmem:[#allocation3 + $0x2f0] sm:$0xff]
    %v158 = vld [vmem:[#allocation3 + $0x2f8] sm:$0xff]
    %v159 = vld [vmem:[#allocation3 + $0x300] sm:$0xff]
    %v160 = vld [vmem:[#allocation3 + $0x308] sm:$0xff]
    %v161 = vld [vmem:[#allocation3 + $0x310] sm:$0xff]
    %v162 = vld [vmem:[#allocation3 + $0x318] sm:$0xff]
    %v163 = vld [vmem:[#allocation3 + $0x320] sm:$0xff]
    %v164 = vld [vmem:[#allocation3 + $0x328] sm:$0xff]
    %v165 = vld [vmem:[#allocation3 + $0x330] sm:$0xff]
    %v166 = vld [vmem:[#allocation3 + $0x338] sm:$0xff]
    %v167 = vld [vmem:[#allocation3 + $0x340] sm:$0xff]
    %v168 = vld [vmem:[#allocation3 + $0x348] sm:$0xff]
    %v169 = vld [vmem:[#allocation3 + $0x350] sm:$0xff]
    %v170 = vld [vmem:[#allocation3 + $0x358] sm:$0xff]
    %v171 = vld [vmem:[#allocation3 + $0x360] sm:$0xff]
    %v172 = vld [vmem:[#allocation3 + $0x368] sm:$0xff]
    %v173 = vld [vmem:[#allocation3 + $0x370] sm:$0xff]
    %v174 = vld [vmem:[#allocation3 + $0x378] sm:$0xff]
    %v175 = vld [vmem:[#allocation3 + $0x380] sm:$0xff]
    %v176 = vld [vmem:[#allocation3 + $0x388] sm:$0xff]
    %v177 = vld [vmem:[#allocation3 + $0x390] sm:$0xff]
    %v178 = vld [vmem:[#allocation3 + $0x398] sm:$0xff]
    %v179 = vld [vmem:[#allocation3 + $0x3a0] sm:$0xff]
    %v180 = vld [vmem:[#allocation3 + $0x3a8] sm:$0xff]
    %v181 = vld [vmem:[#allocation3 + $0x3b0] sm:$0xff]
    %v182 = vld [vmem:[#allocation3 + $0x3b8] sm:$0xff]
    %v183 = vld [vmem:[#allocation3 + $0x3c0] sm:$0xff]
    %v184 = vld [vmem:[#allocation3 + $0x3c8] sm:$0xff]
    %v185 = vld [vmem:[#allocation3 + $0x3d0] sm:$0xff]
    %v186 = vld [vmem:[#allocation3 + $0x3d8] sm:$0xff]
    %v187 = vld [vmem:[#allocation3 + $0x3e0] sm:$0xff]
    %v188 = vld [vmem:[#allocation3 + $0x3e8] sm:$0xff]
    %v189 = vld [vmem:[#allocation3 + $0x3f0] sm:$0xff]
    %v190 = vld [vmem:[#allocation3 + $0x3f8] sm:$0xff]
    %v191 = vld [vmem:[#allocation3 + $0x400] sm:$0xff]
    %v192 = vld [vmem:[#allocation3 + $0x408] sm:$0xff]
    %v193 = vld [vmem:[#allocation3 + $0x410] sm:$0xff]
    %v194 = vld [vmem:[#allocation3 + $0x418] sm:$0xff]
    %v195 = vld [vmem:[#allocation3 + $0x420] sm:$0xff]
    %v196 = vld [vmem:[#allocation3 + $0x428] sm:$0xff]
    %v197 = vld [vmem:[#allocation3 + $0x430] sm:$0xff]
    %v198 = vld [vmem:[#allocation3 + $0x438] sm:$0xff]
    %v199 = vld [vmem:[#allocation3 + $0x440] sm:$0xff]
    %v200 = vld [vmem:[#allocation3 + $0x448] sm:$0xff]
    %v201 = vld [vmem:[#allocation3 + $0x450] sm:$0xff]
    %v202 = vld [vmem:[#allocation3 + $0x458] sm:$0xff]
    %v203 = vld [vmem:[#allocation3 + $0x460] sm:$0xff]
    %v204 = vld [vmem:[#allocation3 + $0x468] sm:$0xff]
    %v205 = vld [vmem:[#allocation3 + $0x470] sm:$0xff]
    %v206 = vld [vmem:[#allocation3 + $0x478] sm:$0xff]
    %v207 = vld [vmem:[#allocation3 + $0x480] sm:$0xff]
    %v208 = vld [vmem:[#allocation3 + $0x488] sm:$0xff]
    %v209 = vld [vmem:[#allocation3 + $0x490] sm:$0xff]
    %v210 = vld [vmem:[#allocation3 + $0x498] sm:$0xff]
    %v211 = vld [vmem:[#allocation3 + $0x4a0] sm:$0xff]
    %v212 = vld [vmem:[#allocation3 + $0x4a8] sm:$0xff]
    %v213 = vld [vmem:[#allocation3 + $0x4b0] sm:$0xff]
    %v214 = vld [vmem:[#allocation3 + $0x4b8] sm:$0xff]
    %v215 = vld [vmem:[#allocation3 + $0x4c0] sm:$0xff]
    %v216 = vld [vmem:[#allocation3 + $0x4c8] sm:$0xff]
    %v217 = vld [vmem:[#allocation3 + $0x4d0] sm:$0xff]
    %v218 = vld [vmem:[#allocation3 + $0x4d8] sm:$0xff]
    %v219 = vld [vmem:[#allocation3 + $0x4e0] sm:$0xff]
    %v220 = vld [vmem:[#allocation3 + $0x4e8] sm:$0xff]
    %v221 = vld [vmem:[#allocation3 + $0x4f0] sm:$0xff]
    %v222 = vld [vmem:[#allocation3 + $0x4f8] sm:$0xff]
    %v223 = vld [vmem:[#allocation3 + $0x500] sm:$0xff]
    %v224 = vld [vmem:[#allocation3 + $0x508] sm:$0xff]
    %v225 = vld [vmem:[#allocation3 + $0x510] sm:$0xff]
    %v226 = vld [vmem:[#allocation3 + $0x518] sm:$0xff]
    %v227 = vld [vmem:[#allocation3 + $0x520] sm:$0xff]
    %v228 = vld [vmem:[#allocation3 + $0x528] sm:$0xff]
    %v229 = vld [vmem:[#allocation3 + $0x530] sm:$0xff]
    %v230 = vld [vmem:[#allocation3 + $0x538] sm:$0xff]
    %v231 = vld [vmem:[#allocation3 + $0x540] sm:$0xff]
    %v232 = vld [vmem:[#allocation3 + $0x548] sm:$0xff]
    %v233 = vld [vmem:[#allocation3 + $0x550] sm:$0xff]
    %v234 = vld [vmem:[#allocation3 + $0x558] sm:$0xff]
    %v235 = vld [vmem:[#allocation3 + $0x560] sm:$0xff]
    %v236 = vld [vmem:[#allocation3 + $0x568] sm:$0xff]
    %v237 = vld [vmem:[#allocation3 + $0x570] sm:$0xff]
    %v238 = vld [vmem:[#allocation3 + $0x578] sm:$0xff]
    %v239 = vld [vmem:[#allocation3 + $0x580] sm:$0xff]
    %v240 = vld [vmem:[#allocation3 + $0x588] sm:$0xff]
    %v241 = vld [vmem:[#allocation3 + $0x590] sm:$0xff]
    %v242 = vld [vmem:[#allocation3 + $0x598] sm:$0xff]
    %v243 = vld [vmem:[#allocation3 + $0x5a0] sm:$0xff]
    %v244 = vld [vmem:[#allocation3 + $0x5a8] sm:$0xff]
    %v245 = vld [vmem:[#allocation3 + $0x5b0] sm:$0xff]
    %v246 = vld [vmem:[#allocation3 + $0x5b8] sm:$0xff]
    %v247 = vld [vmem:[#allocation3 + $0x5c0] sm:$0xff]
    %v248 = vld [vmem:[#allocation3 + $0x5c8] sm:$0xff]
    %v249 = vld [vmem:[#allocation3 + $0x5d0] sm:$0xff]
    %v250 = vld [vmem:[#allocation3 + $0x5d8] sm:$0xff]
    %v251 = vld [vmem:[#allocation3 + $0x5e0] sm:$0xff]
    %v252 = vld [vmem:[#allocation3 + $0x5e8] sm:$0xff]
    %v253 = vld [vmem:[#allocation3 + $0x5f0] sm:$0xff]
    %v254 = vld [vmem:[#allocation3 + $0x5f8] sm:$0xff]
    %v255 = vld [vmem:[#allocation3 + $0x600] sm:$0xff]
    %v256 = vld [vmem:[#allocation3 + $0x608] sm:$0xff]
    %v257 = vld [vmem:[#allocation3 + $0x610] sm:$0xff]
    %v258 = vld [vmem:[#allocation3 + $0x618] sm:$0xff]
    %v259 = vld [vmem:[#allocation3 + $0x620] sm:$0xff]
    %v260 = vld [vmem:[#allocation3 + $0x628] sm:$0xff]
    %v261 = vld [vmem:[#allocation3 + $0x630] sm:$0xff]
    %v262 = vld [vmem:[#allocation3 + $0x638] sm:$0xff]
    %v263 = vld [vmem:[#allocation3 + $0x640] sm:$0xff]
    %v264 = vld [vmem:[#allocation3 + $0x648] sm:$0xff]
    %v265 = vld [vmem:[#allocation3 + $0x650] sm:$0xff]
    %v266 = vld [vmem:[#allocation3 + $0x658] sm:$0xff]
    %v267 = vld [vmem:[#allocation3 + $0x660] sm:$0xff]
    %v268 = vld [vmem:[#allocation3 + $0x668] sm:$0xff]
    %v269 = vld [vmem:[#allocation3 + $0x670] sm:$0xff]
    %v270 = vld [vmem:[#allocation3 + $0x678] sm:$0xff]
    %v271 = vld [vmem:[#allocation3 + $0x680] sm:$0xff]
    %v272 = vld [vmem:[#allocation3 + $0x688] sm:$0xff]
    %v273 = vld [vmem:[#allocation3 + $0x690] sm:$0xff]
    %v274 = vld [vmem:[#allocation3 + $0x698] sm:$0xff]
    %v275 = vld [vmem:[#allocation3 + $0x6a0] sm:$0xff]
    %v276 = vld [vmem:[#allocation3 + $0x6a8] sm:$0xff]
    %v277 = vld [vmem:[#allocation3 + $0x6b0] sm:$0xff]
    %v278 = vld [vmem:[#allocation3 + $0x6b8] sm:$0xff]
    %v279 = vld [vmem:[#allocation3 + $0x6c0] sm:$0xff]
    %v280 = vld [vmem:[#allocation3 + $0x6c8] sm:$0xff]
    %v281 = vld [vmem:[#allocation3 + $0x6d0] sm:$0xff]
    %v282 = vld [vmem:[#allocation3 + $0x6d8] sm:$0xff]
    %v283 = vld [vmem:[#allocation3 + $0x6e0] sm:$0xff]
    %v284 = vld [vmem:[#allocation3 + $0x6e8] sm:$0xff]
    %v285 = vld [vmem:[#allocation3 + $0x6f0] sm:$0xff]
    %v286 = vld [vmem:[#allocation3 + $0x6f8] sm:$0xff]
    %v287 = vpack.c.bf16 %v70, %v63
    %v288 = vpack.c.bf16 %v71, %v64
    %v289 = vpack.c.bf16 %v72, %v65
    %v290 = vpack.c.bf16 %v73, %v66
    %v291 = vpack.c.bf16 %v74, %v67
    %v292 = vpack.c.bf16 %v75, %v68
    %v293 = vpack.c.bf16 %v76, %v69
    %v294 = vpack.c.bf16 %v84, %v77
    %v295 = vpack.c.bf16 %v85, %v78
    %v296 = vpack.c.bf16 %v86, %v79
    %v297 = vpack.c.bf16 %v87, %v80
    %v298 = vpack.c.bf16 %v88, %v81
    %v299 = vpack.c.bf16 %v89, %v82
    %v300 = vpack.c.bf16 %v90, %v83
    %v301 = vpack.c.bf16 %v98, %v91
    %v302 = vpack.c.bf16 %v99, %v92
    %v303 = vpack.c.bf16 %v100, %v93
    %v304 = vpack.c.bf16 %v101, %v94
    %v305 = vpack.c.bf16 %v102, %v95
    %v306 = vpack.c.bf16 %v103, %v96
    %v307 = vpack.c.bf16 %v104, %v97
    %v308 = vpack.c.bf16 %v112, %v105
    %v309 = vpack.c.bf16 %v113, %v106
    %v310 = vpack.c.bf16 %v114, %v107
    %v311 = vpack.c.bf16 %v115, %v108
    %v312 = vpack.c.bf16 %v116, %v109
    %v313 = vpack.c.bf16 %v117, %v110
    %v314 = vpack.c.bf16 %v118, %v111
    %v315 = vpack.c.bf16 %v126, %v119
    %v316 = vpack.c.bf16 %v127, %v120
    %v317 = vpack.c.bf16 %v128, %v121
    %v318 = vpack.c.bf16 %v129, %v122
    %v319 = vpack.c.bf16 %v130, %v123
    %v320 = vpack.c.bf16 %v131, %v124
    %v321 = vpack.c.bf16 %v132, %v125
    %v322 = vpack.c.bf16 %v140, %v133
    %v323 = vpack.c.bf16 %v141, %v134
    %v324 = vpack.c.bf16 %v142, %v135
    %v325 = vpack.c.bf16 %v143, %v136
    %v326 = vpack.c.bf16 %v144, %v137
    %v327 = vpack.c.bf16 %v145, %v138
    %v328 = vpack.c.bf16 %v146, %v139
    %v329 = vpack.c.bf16 %v154, %v147
    %v330 = vpack.c.bf16 %v155, %v148
    %v331 = vpack.c.bf16 %v156, %v149
    %v332 = vpack.c.bf16 %v157, %v150
    %v333 = vpack.c.bf16 %v158, %v151
    %v334 = vpack.c.bf16 %v159, %v152
    %v335 = vpack.c.bf16 %v160, %v153
    %v336 = vpack.c.bf16 %v168, %v161
    %v337 = vpack.c.bf16 %v169, %v162
    %v338 = vpack.c.bf16 %v170, %v163
    %v339 = vpack.c.bf16 %v171, %v164
    %v340 = vpack.c.bf16 %v172, %v165
    %v341 = vpack.c.bf16 %v173, %v166
    %v342 = vpack.c.bf16 %v174, %v167
    %v343 = vpack.c.bf16 %v182, %v175
    %v344 = vpack.c.bf16 %v183, %v176
    %v345 = vpack.c.bf16 %v184, %v177
    %v346 = vpack.c.bf16 %v185, %v178
    %v347 = vpack.c.bf16 %v186, %v179
    %v348 = vpack.c.bf16 %v187, %v180
    %v349 = vpack.c.bf16 %v188, %v181
    %v350 = vpack.c.bf16 %v196, %v189
    %v351 = vpack.c.bf16 %v197, %v190
    %v352 = vpack.c.bf16 %v198, %v191
    %v353 = vpack.c.bf16 %v199, %v192
    %v354 = vpack.c.bf16 %v200, %v193
    %v355 = vpack.c.bf16 %v201, %v194
    %v356 = vpack.c.bf16 %v202, %v195
    %v357 = vpack.c.bf16 %v210, %v203
    %v358 = vpack.c.bf16 %v211, %v204
    %v359 = vpack.c.bf16 %v212, %v205
    %v360 = vpack.c.bf16 %v213, %v206
    %v361 = vpack.c.bf16 %v214, %v207
    %v362 = vpack.c.bf16 %v215, %v208
    %v363 = vpack.c.bf16 %v216, %v209
    %v364 = vpack.c.bf16 %v224, %v217
    %v365 = vpack.c.bf16 %v225, %v218
    %v366 = vpack.c.bf16 %v226, %v219
    %v367 = vpack.c.bf16 %v227, %v220
    %v368 = vpack.c.bf16 %v228, %v221
    %v369 = vpack.c.bf16 %v229, %v222
    %v370 = vpack.c.bf16 %v230, %v223
    %v371 = vpack.c.bf16 %v238, %v231
    %v372 = vpack.c.bf16 %v239, %v232
    %v373 = vpack.c.bf16 %v240, %v233
    %v374 = vpack.c.bf16 %v241, %v234
    %v375 = vpack.c.bf16 %v242, %v235
    %v376 = vpack.c.bf16 %v243, %v236
    %v377 = vpack.c.bf16 %v244, %v237
    %v378 = vpack.c.bf16 %v252, %v245
    %v379 = vpack.c.bf16 %v253, %v246
    %v380 = vpack.c.bf16 %v254, %v247
    %v381 = vpack.c.bf16 %v255, %v248
    %v382 = vpack.c.bf16 %v256, %v249
    %v383 = vpack.c.bf16 %v257, %v250
    %v384 = vpack.c.bf16 %v258, %v251
    %v385 = vpack.c.bf16 %v266, %v259
    %v386 = vpack.c.bf16 %v267, %v260
    %v387 = vpack.c.bf16 %v268, %v261
    %v388 = vpack.c.bf16 %v269, %v262
    %v389 = vpack.c.bf16 %v270, %v263
    %v390 = vpack.c.bf16 %v271, %v264
    %v391 = vpack.c.bf16 %v272, %v265
    %v392 = vpack.c.bf16 %v280, %v273
    %v393 = vpack.c.bf16 %v281, %v274
    %v394 = vpack.c.bf16 %v282, %v275
    %v395 = vpack.c.bf16 %v283, %v276
    %v396 = vpack.c.bf16 %v284, %v277
    %v397 = vpack.c.bf16 %v285, %v278
    %v398 = vpack.c.bf16 %v286, %v279
    %v399 = vld [vmem:[#allocation5] sm:$0xf]
    %v400 = vld [vmem:[#allocation5 + $0x4] sm:$0xf]
    %v401 = vld [vmem:[#allocation5 + $0x8] sm:$0xf]
    %v402 = vld [vmem:[#allocation5 + $0xc] sm:$0xf]
    %v403 = vld [vmem:[#allocation5 + $0x10] sm:$0xf]
    %v404 = vld [vmem:[#allocation5 + $0x14] sm:$0xf]
    %v405 = vld [vmem:[#allocation5 + $0x18] sm:$0xf]
    %v406 = vld [vmem:[#allocation5 + $0x1c] sm:$0xf]
    %v407 = vld [vmem:[#allocation5 + $0x20] sm:$0xf]
    %v408 = vld [vmem:[#allocation5 + $0x24] sm:$0xf]
    %v409 = vld [vmem:[#allocation5 + $0x28] sm:$0xf]
    %v410 = vld [vmem:[#allocation5 + $0x2c] sm:$0xf]
    %v411 = vld [vmem:[#allocation5 + $0x30] sm:$0xf]
    %v412 = vld [vmem:[#allocation5 + $0x34] sm:$0xf]
    %v413 = vld [vmem:[#allocation5 + $0x38] sm:$0xf]
    %v414 = vld [vmem:[#allocation5 + $0x3c] sm:$0xf]
    %v415 = vld [vmem:[#allocation5 + $0x40] sm:$0xf]
    %v416 = vld [vmem:[#allocation5 + $0x44] sm:$0xf]
    %v417 = vld [vmem:[#allocation5 + $0x48] sm:$0xf]
    %v418 = vld [vmem:[#allocation5 + $0x4c] sm:$0xf]
    %v419 = vld [vmem:[#allocation5 + $0x50] sm:$0xf]
    %v420 = vld [vmem:[#allocation5 + $0x54] sm:$0xf]
    %v421 = vld [vmem:[#allocation5 + $0x58] sm:$0xf]
    %v422 = vld [vmem:[#allocation5 + $0x5c] sm:$0xf]
    %v423 = vld [vmem:[#allocation5 + $0x60] sm:$0xf]
    %v424 = vld [vmem:[#allocation5 + $0x64] sm:$0xf]
    %v425 = vld [vmem:[#allocation5 + $0x68] sm:$0xf]
    %v426 = vld [vmem:[#allocation5 + $0x6c] sm:$0xf]
    %v427 = vld [vmem:[#allocation5 + $0x70] sm:$0xf]
    %v428 = vld [vmem:[#allocation5 + $0x74] sm:$0xf]
    %v429 = vld [vmem:[#allocation5 + $0x78] sm:$0xf]
    %v430 = vld [vmem:[#allocation5 + $0x7c] sm:$0xf]
    %v431 = vld [vmem:[#allocation5 + $0x80] sm:$0xf]
    %v432 = vld [vmem:[#allocation5 + $0x84] sm:$0xf]
    %v433 = vld [vmem:[#allocation5 + $0x88] sm:$0xf]
    %v434 = vld [vmem:[#allocation5 + $0x8c] sm:$0xf]
    %v435 = vld [vmem:[#allocation5 + $0x90] sm:$0xf]
    %v436 = vld [vmem:[#allocation5 + $0x94] sm:$0xf]
    %v437 = vld [vmem:[#allocation5 + $0x98] sm:$0xf]
    %v438 = vld [vmem:[#allocation5 + $0x9c] sm:$0xf]
    %v439 = vld [vmem:[#allocation5 + $0xa0] sm:$0xf]
    %v440 = vld [vmem:[#allocation5 + $0xa4] sm:$0xf]
    %v441 = vld [vmem:[#allocation5 + $0xa8] sm:$0xf]
    %v442 = vld [vmem:[#allocation5 + $0xac] sm:$0xf]
    %v443 = vld [vmem:[#allocation5 + $0xb0] sm:$0xf]
    %v444 = vld [vmem:[#allocation5 + $0xb4] sm:$0xf]
    %v445 = vld [vmem:[#allocation5 + $0xb8] sm:$0xf]
    %v446 = vld [vmem:[#allocation5 + $0xbc] sm:$0xf]
    %v447 = vld [vmem:[#allocation5 + $0xc0] sm:$0xf]
    %v448 = vld [vmem:[#allocation5 + $0xc4] sm:$0xf]
    %v449 = vld [vmem:[#allocation5 + $0xc8] sm:$0xf]
    %v450 = vld [vmem:[#allocation5 + $0xcc] sm:$0xf]
    %v451 = vld [vmem:[#allocation5 + $0xd0] sm:$0xf]
    %v452 = vld [vmem:[#allocation5 + $0xd4] sm:$0xf]
    %v453 = vld [vmem:[#allocation5 + $0xd8] sm:$0xf]
    %v454 = vld [vmem:[#allocation5 + $0xdc] sm:$0xf]
    %v455 = vld [vmem:[#allocation5 + $0xe0] sm:$0xf]
    %v456 = vld [vmem:[#allocation5 + $0xe4] sm:$0xf]
    %v457 = vld [vmem:[#allocation5 + $0xe8] sm:$0xf]
    %v458 = vld [vmem:[#allocation5 + $0xec] sm:$0xf]
    %v459 = vld [vmem:[#allocation5 + $0xf0] sm:$0xf]
    %v460 = vld [vmem:[#allocation5 + $0xf4] sm:$0xf]
    %v461 = vld [vmem:[#allocation5 + $0xf8] sm:$0xf]
    %v462 = vld [vmem:[#allocation5 + $0xfc] sm:$0xf]
    %v463 = vld [vmem:[#allocation5 + $0x100] sm:$0xf]
    %v464 = vld [vmem:[#allocation5 + $0x104] sm:$0xf]
    %v465 = vld [vmem:[#allocation5 + $0x108] sm:$0xf]
    %v466 = vld [vmem:[#allocation5 + $0x10c] sm:$0xf]
    %v467 = vld [vmem:[#allocation5 + $0x110] sm:$0xf]
    %v468 = vld [vmem:[#allocation5 + $0x114] sm:$0xf]
    %v469 = vld [vmem:[#allocation5 + $0x118] sm:$0xf]
    %v470 = vld [vmem:[#allocation5 + $0x11c] sm:$0xf]
    %v471 = vld [vmem:[#allocation5 + $0x120] sm:$0xf]
    %v472 = vld [vmem:[#allocation5 + $0x124] sm:$0xf]
    %v473 = vld [vmem:[#allocation5 + $0x128] sm:$0xf]
    %v474 = vld [vmem:[#allocation5 + $0x12c] sm:$0xf]
    %v475 = vld [vmem:[#allocation5 + $0x130] sm:$0xf]
    %v476 = vld [vmem:[#allocation5 + $0x134] sm:$0xf]
    %v477 = vld [vmem:[#allocation5 + $0x138] sm:$0xf]
    %v478 = vld [vmem:[#allocation5 + $0x13c] sm:$0xf]
    %v479 = vld [vmem:[#allocation5 + $0x140] sm:$0xf]
    %v480 = vld [vmem:[#allocation5 + $0x144] sm:$0xf]
    %v481 = vld [vmem:[#allocation5 + $0x148] sm:$0xf]
    %v482 = vld [vmem:[#allocation5 + $0x14c] sm:$0xf]
    %v483 = vld [vmem:[#allocation5 + $0x150] sm:$0xf]
    %v484 = vld [vmem:[#allocation5 + $0x154] sm:$0xf]
    %v485 = vld [vmem:[#allocation5 + $0x158] sm:$0xf]
    %v486 = vld [vmem:[#allocation5 + $0x15c] sm:$0xf]
    %v487 = vld [vmem:[#allocation5 + $0x160] sm:$0xf]
    %v488 = vld [vmem:[#allocation5 + $0x164] sm:$0xf]
    %v489 = vld [vmem:[#allocation5 + $0x168] sm:$0xf]
    %v490 = vld [vmem:[#allocation5 + $0x16c] sm:$0xf]
    %v491 = vld [vmem:[#allocation5 + $0x170] sm:$0xf]
    %v492 = vld [vmem:[#allocation5 + $0x174] sm:$0xf]
    %v493 = vld [vmem:[#allocation5 + $0x178] sm:$0xf]
    %v494 = vld [vmem:[#allocation5 + $0x17c] sm:$0xf]
    %v495 = vld [vmem:[#allocation5 + $0x180] sm:$0xf]
    %v496 = vld [vmem:[#allocation5 + $0x184] sm:$0xf]
    %v497 = vld [vmem:[#allocation5 + $0x188] sm:$0xf]
    %v498 = vld [vmem:[#allocation5 + $0x18c] sm:$0xf]
    %v499 = vld [vmem:[#allocation5 + $0x190] sm:$0xf]
    %v500 = vld [vmem:[#allocation5 + $0x194] sm:$0xf]
    %v501 = vld [vmem:[#allocation5 + $0x198] sm:$0xf]
    %v502 = vld [vmem:[#allocation5 + $0x19c] sm:$0xf]
    %v503 = vld [vmem:[#allocation5 + $0x1a0] sm:$0xf]
    %v504 = vld [vmem:[#allocation5 + $0x1a4] sm:$0xf]
    %v505 = vld [vmem:[#allocation5 + $0x1a8] sm:$0xf]
    %v506 = vld [vmem:[#allocation5 + $0x1ac] sm:$0xf]
    %v507 = vld [vmem:[#allocation5 + $0x1b0] sm:$0xf]
    %v508 = vld [vmem:[#allocation5 + $0x1b4] sm:$0xf]
    %v509 = vld [vmem:[#allocation5 + $0x1b8] sm:$0xf]
    %v510 = vld [vmem:[#allocation5 + $0x1bc] sm:$0xf]
    %v511 = vld [vmem:[%s2] sm:$0x1]
    %v513 = vlaneseq
    %v514 = vshrl.u32 %v513, 7
    %v515 = vsub.s32 0, %v514
    %v516 = vrot.slane %v511, %v515
    %v630 = vunpack.c.l.b16 %v399
    %v631 = vunpack.c.l.b16 %v400
    %v632 = vunpack.c.l.b16 %v401
    %v633 = vunpack.c.l.b16 %v402
    %v634 = vunpack.c.l.b16 %v403
    %v635 = vunpack.c.l.b16 %v404
    %v636 = vunpack.c.l.b16 %v405
    %v637 = vunpack.c.l.b16 %v406
    %v638 = vunpack.c.l.b16 %v407
    %v639 = vunpack.c.l.b16 %v408
    %v640 = vunpack.c.l.b16 %v409
    %v641 = vunpack.c.l.b16 %v410
    %v642 = vunpack.c.l.b16 %v411
    %v643 = vunpack.c.l.b16 %v412
    %v644 = vunpack.c.l.b16 %v413
    %v645 = vunpack.c.l.b16 %v414
    %v646 = vunpack.c.l.b16 %v415
    %v647 = vunpack.c.l.b16 %v416
    %v648 = vunpack.c.l.b16 %v417
    %v649 = vunpack.c.l.b16 %v418
    %v650 = vunpack.c.l.b16 %v419
    %v651 = vunpack.c.l.b16 %v420
    %v652 = vunpack.c.l.b16 %v421
    %v653 = vunpack.c.l.b16 %v422
    %v654 = vunpack.c.l.b16 %v423
    %v655 = vunpack.c.l.b16 %v424
    %v656 = vunpack.c.l.b16 %v425
    %v657 = vunpack.c.l.b16 %v426
    %v658 = vunpack.c.l.b16 %v427
    %v659 = vunpack.c.l.b16 %v428
    %v660 = vunpack.c.l.b16 %v429
    %v661 = vunpack.c.l.b16 %v430
    %v662 = vunpack.c.l.b16 %v431
    %v663 = vunpack.c.l.b16 %v432
    %v664 = vunpack.c.l.b16 %v433
    %v665 = vunpack.c.l.b16 %v434
    %v666 = vunpack.c.l.b16 %v435
    %v667 = vunpack.c.l.b16 %v436
    %v668 = vunpack.c.l.b16 %v437
    %v669 = vunpack.c.l.b16 %v438
    %v670 = vunpack.c.l.b16 %v439
    %v671 = vunpack.c.l.b16 %v440
    %v672 = vunpack.c.l.b16 %v441
    %v673 = vunpack.c.l.b16 %v442
    %v674 = vunpack.c.l.b16 %v443
    %v675 = vunpack.c.l.b16 %v444
    %v676 = vunpack.c.l.b16 %v445
    %v677 = vunpack.c.l.b16 %v446
    %v678 = vunpack.c.l.b16 %v447
    %v679 = vunpack.c.l.b16 %v448
    %v680 = vunpack.c.l.b16 %v449
    %v681 = vunpack.c.l.b16 %v450
    %v682 = vunpack.c.l.b16 %v451
    %v683 = vunpack.c.l.b16 %v452
    %v684 = vunpack.c.l.b16 %v453
    %v685 = vunpack.c.l.b16 %v454
    %v686 = vunpack.c.l.b16 %v455
    %v687 = vunpack.c.l.b16 %v456
    %v688 = vunpack.c.l.b16 %v457
    %v689 = vunpack.c.l.b16 %v458
    %v690 = vunpack.c.l.b16 %v459
    %v691 = vunpack.c.l.b16 %v460
    %v692 = vunpack.c.l.b16 %v461
    %v693 = vunpack.c.l.b16 %v462
    %v694 = vunpack.c.l.b16 %v463
    %v695 = vunpack.c.l.b16 %v464
    %v696 = vunpack.c.l.b16 %v465
    %v697 = vunpack.c.l.b16 %v466
    %v698 = vunpack.c.l.b16 %v467
    %v699 = vunpack.c.l.b16 %v468
    %v700 = vunpack.c.l.b16 %v469
    %v701 = vunpack.c.l.b16 %v470
    %v702 = vunpack.c.l.b16 %v471
    %v703 = vunpack.c.l.b16 %v472
    %v704 = vunpack.c.l.b16 %v473
    %v705 = vunpack.c.l.b16 %v474
    %v706 = vunpack.c.l.b16 %v475
    %v707 = vunpack.c.l.b16 %v476
    %v708 = vunpack.c.l.b16 %v477
    %v709 = vunpack.c.l.b16 %v478
    %v710 = vunpack.c.l.b16 %v479
    %v711 = vunpack.c.l.b16 %v480
    %v712 = vunpack.c.l.b16 %v481
    %v713 = vunpack.c.l.b16 %v482
    %v714 = vunpack.c.l.b16 %v483
    %v715 = vunpack.c.l.b16 %v484
    %v716 = vunpack.c.l.b16 %v485
    %v717 = vunpack.c.l.b16 %v486
    %v718 = vunpack.c.l.b16 %v487
    %v719 = vunpack.c.l.b16 %v488
    %v720 = vunpack.c.l.b16 %v489
    %v721 = vunpack.c.l.b16 %v490
    %v722 = vunpack.c.l.b16 %v491
    %v723 = vunpack.c.l.b16 %v492
    %v724 = vunpack.c.l.b16 %v493
    %v725 = vunpack.c.l.b16 %v494
    %v726 = vunpack.c.l.b16 %v495
    %v727 = vunpack.c.l.b16 %v496
    %v728 = vunpack.c.l.b16 %v497
    %v729 = vunpack.c.l.b16 %v498
    %v730 = vunpack.c.l.b16 %v499
    %v731 = vunpack.c.l.b16 %v500
    %v732 = vunpack.c.l.b16 %v501
    %v733 = vunpack.c.l.b16 %v502
    %v734 = vunpack.c.l.b16 %v503
    %v735 = vunpack.c.l.b16 %v504
    %v736 = vunpack.c.l.b16 %v505
    %v737 = vunpack.c.l.b16 %v506
    %v738 = vunpack.c.l.b16 %v507
    %v739 = vunpack.c.l.b16 %v508
    %v740 = vunpack.c.l.b16 %v509
    %v741 = vunpack.c.l.b16 %v510
    %v742 = vpack.c.b16 %v631, %v630
    %v743 = vpack.c.b16 %v633, %v632
    %v744 = vpack.c.b16 %v635, %v634
    %v745 = vpack.c.b16 %v637, %v636
    %v746 = vpack.c.b16 %v639, %v638
    %v747 = vpack.c.b16 %v641, %v640
    %v748 = vpack.c.b16 %v643, %v642
    %v749 = vpack.c.b16 %v645, %v644
    %v750 = vpack.c.b16 %v647, %v646
    %v751 = vpack.c.b16 %v649, %v648
    %v752 = vpack.c.b16 %v651, %v650
    %v753 = vpack.c.b16 %v653, %v652
    %v754 = vpack.c.b16 %v655, %v654
    %v755 = vpack.c.b16 %v657, %v656
    %v756 = vpack.c.b16 %v659, %v658
    %v757 = vpack.c.b16 %v661, %v660
    %v758 = vpack.c.b16 %v663, %v662
    %v759 = vpack.c.b16 %v665, %v664
    %v760 = vpack.c.b16 %v667, %v666
    %v761 = vpack.c.b16 %v669, %v668
    %v762 = vpack.c.b16 %v671, %v670
    %v763 = vpack.c.b16 %v673, %v672
    %v764 = vpack.c.b16 %v675, %v674
    %v765 = vpack.c.b16 %v677, %v676
    %v766 = vpack.c.b16 %v679, %v678
    %v767 = vpack.c.b16 %v681, %v680
    %v768 = vpack.c.b16 %v683, %v682
    %v769 = vpack.c.b16 %v685, %v684
    %v770 = vpack.c.b16 %v687, %v686
    %v771 = vpack.c.b16 %v689, %v688
    %v772 = vpack.c.b16 %v691, %v690
    %v773 = vpack.c.b16 %v693, %v692
    %v774 = vpack.c.b16 %v695, %v694
    %v775 = vpack.c.b16 %v697, %v696
    %v776 = vpack.c.b16 %v699, %v698
    %v777 = vpack.c.b16 %v701, %v700
    %v778 = vpack.c.b16 %v703, %v702
    %v779 = vpack.c.b16 %v705, %v704
    %v780 = vpack.c.b16 %v707, %v706
    %v781 = vpack.c.b16 %v709, %v708
    %v782 = vpack.c.b16 %v711, %v710
    %v783 = vpack.c.b16 %v713, %v712
    %v784 = vpack.c.b16 %v715, %v714
    %v785 = vpack.c.b16 %v717, %v716
    %v786 = vpack.c.b16 %v719, %v718
    %v787 = vpack.c.b16 %v721, %v720
    %v788 = vpack.c.b16 %v723, %v722
    %v789 = vpack.c.b16 %v725, %v724
    %v790 = vpack.c.b16 %v727, %v726
    %v791 = vpack.c.b16 %v729, %v728
    %v792 = vpack.c.b16 %v731, %v730
    %v793 = vpack.c.b16 %v733, %v732
    %v794 = vpack.c.b16 %v735, %v734
    %v795 = vpack.c.b16 %v737, %v736
    %v796 = vpack.c.b16 %v739, %v738
    %v797 = vpack.c.b16 %v741, %v740
    %854 = vmatprep.subr.bf16.mxu0 0
    %855 = vmatpush1.bf16.msra.mxu0 %v742
    %856 = vmatprep.subr.bf16.mxu0 0
    %857 = vmatpush1.bf16.msra.mxu0 %v743
    %858 = vmatprep.subr.bf16.mxu0 0
    %859 = vmatpush1.bf16.msra.mxu0 %v744
    %860 = vmatprep.subr.bf16.mxu0 0
    %861 = vmatpush1.bf16.msra.mxu0 %v745
    %862 = vmatprep.subr.bf16.mxu0 0
    %863 = vmatpush1.bf16.msra.mxu0 %v746
    %864 = vmatprep.subr.bf16.mxu0 0
    %865 = vmatpush1.bf16.msra.mxu0 %v747
    %866 = vmatprep.subr.bf16.mxu0 0
    %867 = vmatpush1.bf16.msra.mxu0 %v748
    %868 = vmatprep.subr.bf16.mxu0 0
    %869 = vmatpush1.bf16.msra.mxu0 %v749
    %870 = vmatprep.subr.bf16.mxu0 0
    %871 = vmatpush1.bf16.msra.mxu0 %v750
    %872 = vmatprep.subr.bf16.mxu0 0
    %873 = vmatpush1.bf16.msra.mxu0 %v751
    %874 = vmatprep.subr.bf16.mxu0 0
    %875 = vmatpush1.bf16.msra.mxu0 %v752
    %876 = vmatprep.subr.bf16.mxu0 0
    %877 = vmatpush1.bf16.msra.mxu0 %v753
    %878 = vmatprep.subr.bf16.mxu0 0
    %879 = vmatpush1.bf16.msra.mxu0 %v754
    %880 = vmatprep.subr.bf16.mxu0 0
    %881 = vmatpush1.bf16.msra.mxu0 %v755
    %882 = vmatprep.subr.bf16.mxu0 0
    %883 = vmatpush1.bf16.msra.mxu0 %v756
    %884 = vmatprep.subr.bf16.mxu0 0
    %885 = vmatpush1.bf16.msra.mxu0 %v757
    %886 = vmatprep.mubr.bf16.mxu0 %v288
    %887 = vmatmul.mubr.bf16.gmra.mrb[0].mxu0 %v287
    %v888 = vpop.f32.mrb[0].mxu0
    %v889 = vadd.f32 %v516, %v888
    %v890 = vpop.f32.mrb[0].mxu0
    %v891 = vpop.f32.mrb[0].mxu0
    %v892 = vadd.f32 %v516, %v891
    %v893 = vpop.f32.mrb[0].mxu0
    %894 = vmatprep.mubr.bf16.mxu0 %v295
    %895 = vmatmul.mubr.bf16.gmra.mrb[0].mxu0 %v294
    %v896 = vpop.f32.mrb[0].mxu0
    %v897 = vadd.f32 %v516, %v896
    %v898 = vpop.f32.mrb[0].mxu0
    %v899 = vpop.f32.mrb[0].mxu0
    %v900 = vadd.f32 %v516, %v899
    %v901 = vpop.f32.mrb[0].mxu0
    %902 = vmatprep.mubr.bf16.mxu0 %v302
    %903 = vmatmul.mubr.bf16.gmra.mrb[0].mxu0 %v301
    %v904 = vpop.f32.mrb[0].mxu0
    %v905 = vadd.f32 %v516, %v904
    %v906 = vpop.f32.mrb[0].mxu0
    %v907 = vpop.f32.mrb[0].mxu0
    %v908 = vadd.f32 %v516, %v907
    %v909 = vpop.f32.mrb[0].mxu0
    %910 = vmatprep.mubr.bf16.mxu0 %v309
    %911 = vmatmul.mubr.bf16.gmra.mrb[0].mxu0 %v308
    %v912 = vpop.f32.mrb[0].mxu0
    %v913 = vadd.f32 %v516, %v912
    %v914 = vpop.f32.mrb[0].mxu0
    %v915 = vpop.f32.mrb[0].mxu0
    %v916 = vadd.f32 %v516, %v915
    %v917 = vpop.f32.mrb[0].mxu0
    %918 = vmatprep.mubr.bf16.mxu0 %v316
    %919 = vmatmul.mubr.bf16.gmra.mrb[0].mxu0 %v315
    %v920 = vpop.f32.mrb[0].mxu0
    %v921 = vadd.f32 %v516, %v920
    %v922 = vpop.f32.mrb[0].mxu0
    %v923 = vpop.f32.mrb[0].mxu0
    %v924 = vadd.f32 %v516, %v923
    %v925 = vpop.f32.mrb[0].mxu0
    %926 = vmatprep.mubr.bf16.mxu0 %v323
    %927 = vmatmul.mubr.bf16.gmra.mrb[0].mxu0 %v322
    %v928 = vpop.f32.mrb[0].mxu0
    %v929 = vadd.f32 %v516, %v928
    %v930 = vpop.f32.mrb[0].mxu0
    %v931 = vpop.f32.mrb[0].mxu0
    %v932 = vadd.f32 %v516, %v931
    %v933 = vpop.f32.mrb[0].mxu0
    %934 = vmatprep.mubr.bf16.mxu0 %v330
    %935 = vmatmul.mubr.bf16.gmra.mrb[0].mxu0 %v329
    %v936 = vpop.f32.mrb[0].mxu0
    %v937 = vadd.f32 %v516, %v936
    %v938 = vpop.f32.mrb[0].mxu0
    %v939 = vpop.f32.mrb[0].mxu0
    %v940 = vadd.f32 %v516, %v939
    %v941 = vpop.f32.mrb[0].mxu0
    %942 = vmatprep.mubr.bf16.mxu0 %v337
    %943 = vmatmul.mubr.bf16.gmra.mrb[0].mxu0 %v336
    %v944 = vpop.f32.mrb[0].mxu0
    %v945 = vadd.f32 %v516, %v944
    %v946 = vpop.f32.mrb[0].mxu0
    %v947 = vpop.f32.mrb[0].mxu0
    %v948 = vadd.f32 %v516, %v947
    %v949 = vpop.f32.mrb[0].mxu0
    %950 = vmatprep.mubr.bf16.mxu0 %v344
    %951 = vmatmul.mubr.bf16.gmra.mrb[0].mxu0 %v343
    %v952 = vpop.f32.mrb[0].mxu0
    %v953 = vadd.f32 %v516, %v952
    %v954 = vpop.f32.mrb[0].mxu0
    %v955 = vpop.f32.mrb[0].mxu0
    %v956 = vadd.f32 %v516, %v955
    %v957 = vpop.f32.mrb[0].mxu0
    %958 = vmatprep.mubr.bf16.mxu0 %v351
    %959 = vmatmul.mubr.bf16.gmra.mrb[0].mxu0 %v350
    %v960 = vpop.f32.mrb[0].mxu0
    %v961 = vadd.f32 %v516, %v960
    %v962 = vpop.f32.mrb[0].mxu0
    %v963 = vpop.f32.mrb[0].mxu0
    %v964 = vadd.f32 %v516, %v963
    %v965 = vpop.f32.mrb[0].mxu0
    %966 = vmatprep.mubr.bf16.mxu0 %v358
    %967 = vmatmul.mubr.bf16.gmra.mrb[0].mxu0 %v357
    %v968 = vpop.f32.mrb[0].mxu0
    %v969 = vadd.f32 %v516, %v968
    %v970 = vpop.f32.mrb[0].mxu0
    %v971 = vpop.f32.mrb[0].mxu0
    %v972 = vadd.f32 %v516, %v971
    %v973 = vpop.f32.mrb[0].mxu0
    %974 = vmatprep.mubr.bf16.mxu0 %v365
    %975 = vmatmul.mubr.bf16.gmra.mrb[0].mxu0 %v364
    %v976 = vpop.f32.mrb[0].mxu0
    %v977 = vadd.f32 %v516, %v976
    %v978 = vpop.f32.mrb[0].mxu0
    %v979 = vpop.f32.mrb[0].mxu0
    %v980 = vadd.f32 %v516, %v979
    %v981 = vpop.f32.mrb[0].mxu0
    %982 = vmatprep.mubr.bf16.mxu0 %v372
    %983 = vmatmul.mubr.bf16.gmra.mrb[0].mxu0 %v371
    %v984 = vpop.f32.mrb[0].mxu0
    %v985 = vadd.f32 %v516, %v984
    %v986 = vpop.f32.mrb[0].mxu0
    %v987 = vpop.f32.mrb[0].mxu0
    %v988 = vadd.f32 %v516, %v987
    %v989 = vpop.f32.mrb[0].mxu0
    %990 = vmatprep.mubr.bf16.mxu0 %v379
    %991 = vmatmul.mubr.bf16.gmra.mrb[0].mxu0 %v378
    %v992 = vpop.f32.mrb[0].mxu0
    %v993 = vadd.f32 %v516, %v992
    %v994 = vpop.f32.mrb[0].mxu0
    %v995 = vpop.f32.mrb[0].mxu0
    %v996 = vadd.f32 %v516, %v995
    %v997 = vpop.f32.mrb[0].mxu0
    %998 = vmatprep.mubr.bf16.mxu0 %v386
    %999 = vmatmul.mubr.bf16.gmra.mrb[0].mxu0 %v385
    %v1000 = vpop.f32.mrb[0].mxu0
    %v1001 = vadd.f32 %v516, %v1000
    %v1002 = vpop.f32.mrb[0].mxu0
    %v1003 = vpop.f32.mrb[0].mxu0
    %v1004 = vadd.f32 %v516, %v1003
    %v1005 = vpop.f32.mrb[0].mxu0
    %1006 = vmatprep.mubr.bf16.mxu0 %v393
    %1007 = vmatmul.mubr.bf16.gmra.mrb[0].mxu0 %v392
    %v1008 = vpop.f32.mrb[0].mxu0
    %v1009 = vadd.f32 %v516, %v1008
    %v1010 = vpop.f32.mrb[0].mxu0
    %v1011 = vpop.f32.mrb[0].mxu0
    %v1012 = vadd.f32 %v516, %v1011
    %v1013 = vpop.f32.mrb[0].mxu0
    %1014 = vdwg.mxu0
    %1015 = vmatprep.subr.bf16.mxu0 0
    %1016 = vmatpush1.bf16.msra.mxu0 %v758
    %1017 = vmatprep.subr.bf16.mxu0 0
    %1018 = vmatpush1.bf16.msra.mxu0 %v759
    %1019 = vmatprep.subr.bf16.mxu0 0
    %1020 = vmatpush1.bf16.msra.mxu0 %v760
    %1021 = vmatprep.subr.bf16.mxu0 0
    %1022 = vmatpush1.bf16.msra.mxu0 %v761
    %1023 = vmatprep.subr.bf16.mxu0 0
    %1024 = vmatpush1.bf16.msra.mxu0 %v762
    %1025 = vmatprep.subr.bf16.mxu0 0
    %1026 = vmatpush1.bf16.msra.mxu0 %v763
    %1027 = vmatprep.subr.bf16.mxu0 0
    %1028 = vmatpush1.bf16.msra.mxu0 %v764
    %1029 = vmatprep.subr.bf16.mxu0 0
    %1030 = vmatpush1.bf16.msra.mxu0 %v765
    %1031 = vmatprep.subr.bf16.mxu0 0
    %1032 = vmatpush1.bf16.msra.mxu0 %v766
    %1033 = vmatprep.subr.bf16.mxu0 0
    %1034 = vmatpush1.bf16.msra.mxu0 %v767
    %1035 = vmatprep.subr.bf16.mxu0 0
    %1036 = vmatpush1.bf16.msra.mxu0 %v768
    %1037 = vmatprep.subr.bf16.mxu0 0
    %1038 = vmatpush1.bf16.msra.mxu0 %v769
    %1039 = vmatprep.subr.bf16.mxu0 0
    %1040 = vmatpush1.bf16.msra.mxu0 %v770
    %1041 = vmatprep.subr.bf16.mxu0 0
    %1042 = vmatpush1.bf16.msra.mxu0 %v771
    %1043 = vmatprep.subr.bf16.mxu0 0
    %1044 = vmatpush1.bf16.msra.mxu0 %v772
    %1045 = vmatprep.subr.bf16.mxu0 0
    %1046 = vmatpush1.bf16.msra.mxu0 %v773
    %1047 = vmatprep.mubr.bf16.mxu0 %v290
    %1048 = vmatmul.mubr.bf16.gmra.mrb[0].mxu0 %v289
    %v1049 = vpop.f32.mrb[0].mxu0
    %v1050 = vadd.f32 %v889, %v1049
    %v1051 = vpop.f32.mrb[0].mxu0
    %v1052 = vpop.f32.mrb[0].mxu0
    %v1053 = vadd.f32 %v892, %v1052
    %v1054 = vpop.f32.mrb[0].mxu0
    %1055 = vmatprep.mubr.bf16.mxu0 %v297
    %1056 = vmatmul.mubr.bf16.gmra.mrb[0].mxu0 %v296
    %v1057 = vpop.f32.mrb[0].mxu0
    %v1058 = vadd.f32 %v897, %v1057
    %v1059 = vpop.f32.mrb[0].mxu0
    %v1060 = vpop.f32.mrb[0].mxu0
    %v1061 = vadd.f32 %v900, %v1060
    %v1062 = vpop.f32.mrb[0].mxu0
    %1063 = vmatprep.mubr.bf16.mxu0 %v304
    %1064 = vmatmul.mubr.bf16.gmra.mrb[0].mxu0 %v303
    %v1065 = vpop.f32.mrb[0].mxu0
    %v1066 = vadd.f32 %v905, %v1065
    %v1067 = vpop.f32.mrb[0].mxu0
    %v1068 = vpop.f32.mrb[0].mxu0
    %v1069 = vadd.f32 %v908, %v1068
    %v1070 = vpop.f32.mrb[0].mxu0
    %1071 = vmatprep.mubr.bf16.mxu0 %v311
    %1072 = vmatmul.mubr.bf16.gmra.mrb[0].mxu0 %v310
    %v1073 = vpop.f32.mrb[0].mxu0
    %v1074 = vadd.f32 %v913, %v1073
    %v1075 = vpop.f32.mrb[0].mxu0
    %v1076 = vpop.f32.mrb[0].mxu0
    %v1077 = vadd.f32 %v916, %v1076
    %v1078 = vpop.f32.mrb[0].mxu0
    %1079 = vmatprep.mubr.bf16.mxu0 %v318
    %1080 = vmatmul.mubr.bf16.gmra.mrb[0].mxu0 %v317
    %v1081 = vpop.f32.mrb[0].mxu0
    %v1082 = vadd.f32 %v921, %v1081
    %v1083 = vpop.f32.mrb[0].mxu0
    %v1084 = vpop.f32.mrb[0].mxu0
    %v1085 = vadd.f32 %v924, %v1084
    %v1086 = vpop.f32.mrb[0].mxu0
    %1087 = vmatprep.mubr.bf16.mxu0 %v325
    %1088 = vmatmul.mubr.bf16.gmra.mrb[0].mxu0 %v324
    %v1089 = vpop.f32.mrb[0].mxu0
    %v1090 = vadd.f32 %v929, %v1089
    %v1091 = vpop.f32.mrb[0].mxu0
    %v1092 = vpop.f32.mrb[0].mxu0
    %v1093 = vadd.f32 %v932, %v1092
    %v1094 = vpop.f32.mrb[0].mxu0
    %1095 = vmatprep.mubr.bf16.mxu0 %v332
    %1096 = vmatmul.mubr.bf16.gmra.mrb[0].mxu0 %v331
    %v1097 = vpop.f32.mrb[0].mxu0
    %v1098 = vadd.f32 %v937, %v1097
    %v1099 = vpop.f32.mrb[0].mxu0
    %v1100 = vpop.f32.mrb[0].mxu0
    %v1101 = vadd.f32 %v940, %v1100
    %v1102 = vpop.f32.mrb[0].mxu0
    %1103 = vmatprep.mubr.bf16.mxu0 %v339
    %1104 = vmatmul.mubr.bf16.gmra.mrb[0].mxu0 %v338
    %v1105 = vpop.f32.mrb[0].mxu0
    %v1106 = vadd.f32 %v945, %v1105
    %v1107 = vpop.f32.mrb[0].mxu0
    %v1108 = vpop.f32.mrb[0].mxu0
    %v1109 = vadd.f32 %v948, %v1108
    %v1110 = vpop.f32.mrb[0].mxu0
    %1111 = vmatprep.mubr.bf16.mxu0 %v346
    %1112 = vmatmul.mubr.bf16.gmra.mrb[0].mxu0 %v345
    %v1113 = vpop.f32.mrb[0].mxu0
    %v1114 = vadd.f32 %v953, %v1113
    %v1115 = vpop.f32.mrb[0].mxu0
    %v1116 = vpop.f32.mrb[0].mxu0
    %v1117 = vadd.f32 %v956, %v1116
    %v1118 = vpop.f32.mrb[0].mxu0
    %1119 = vmatprep.mubr.bf16.mxu0 %v353
    %1120 = vmatmul.mubr.bf16.gmra.mrb[0].mxu0 %v352
    %v1121 = vpop.f32.mrb[0].mxu0
    %v1122 = vadd.f32 %v961, %v1121
    %v1123 = vpop.f32.mrb[0].mxu0
    %v1124 = vpop.f32.mrb[0].mxu0
    %v1125 = vadd.f32 %v964, %v1124
    %v1126 = vpop.f32.mrb[0].mxu0
    %1127 = vmatprep.mubr.bf16.mxu0 %v360
    %1128 = vmatmul.mubr.bf16.gmra.mrb[0].mxu0 %v359
    %v1129 = vpop.f32.mrb[0].mxu0
    %v1130 = vadd.f32 %v969, %v1129
    %v1131 = vpop.f32.mrb[0].mxu0
    %v1132 = vpop.f32.mrb[0].mxu0
    %v1133 = vadd.f32 %v972, %v1132
    %v1134 = vpop.f32.mrb[0].mxu0
    %1135 = vmatprep.mubr.bf16.mxu0 %v367
    %1136 = vmatmul.mubr.bf16.gmra.mrb[0].mxu0 %v366
    %v1137 = vpop.f32.mrb[0].mxu0
    %v1138 = vadd.f32 %v977, %v1137
    %v1139 = vpop.f32.mrb[0].mxu0
    %v1140 = vpop.f32.mrb[0].mxu0
    %v1141 = vadd.f32 %v980, %v1140
    %v1142 = vpop.f32.mrb[0].mxu0
    %1143 = vmatprep.mubr.bf16.mxu0 %v374
    %1144 = vmatmul.mubr.bf16.gmra.mrb[0].mxu0 %v373
    %v1145 = vpop.f32.mrb[0].mxu0
    %v1146 = vadd.f32 %v985, %v1145
    %v1147 = vpop.f32.mrb[0].mxu0
    %v1148 = vpop.f32.mrb[0].mxu0
    %v1149 = vadd.f32 %v988, %v1148
    %v1150 = vpop.f32.mrb[0].mxu0
    %1151 = vmatprep.mubr.bf16.mxu0 %v381
    %1152 = vmatmul.mubr.bf16.gmra.mrb[0].mxu0 %v380
    %v1153 = vpop.f32.mrb[0].mxu0
    %v1154 = vadd.f32 %v993, %v1153
    %v1155 = vpop.f32.mrb[0].mxu0
    %v1156 = vpop.f32.mrb[0].mxu0
    %v1157 = vadd.f32 %v996, %v1156
    %v1158 = vpop.f32.mrb[0].mxu0
    %1159 = vmatprep.mubr.bf16.mxu0 %v388
    %1160 = vmatmul.mubr.bf16.gmra.mrb[0].mxu0 %v387
    %v1161 = vpop.f32.mrb[0].mxu0
    %v1162 = vadd.f32 %v1001, %v1161
    %v1163 = vpop.f32.mrb[0].mxu0
    %v1164 = vpop.f32.mrb[0].mxu0
    %v1165 = vadd.f32 %v1004, %v1164
    %v1166 = vpop.f32.mrb[0].mxu0
    %1167 = vmatprep.mubr.bf16.mxu0 %v395
    %1168 = vmatmul.mubr.bf16.gmra.mrb[0].mxu0 %v394
    %v1169 = vpop.f32.mrb[0].mxu0
    %v1170 = vadd.f32 %v1009, %v1169
    %v1171 = vpop.f32.mrb[0].mxu0
    %v1172 = vpop.f32.mrb[0].mxu0
    %v1173 = vadd.f32 %v1012, %v1172
    %v1174 = vpop.f32.mrb[0].mxu0
    %1175 = vdwg.mxu0
    %1176 = vmatprep.subr.bf16.mxu0 0
    %1177 = vmatpush1.bf16.msra.mxu0 %v774
    %1178 = vmatprep.subr.bf16.mxu0 0
    %1179 = vmatpush1.bf16.msra.mxu0 %v775
    %1180 = vmatprep.subr.bf16.mxu0 0
    %1181 = vmatpush1.bf16.msra.mxu0 %v776
    %1182 = vmatprep.subr.bf16.mxu0 0
    %1183 = vmatpush1.bf16.msra.mxu0 %v777
    %1184 = vmatprep.subr.bf16.mxu0 0
    %1185 = vmatpush1.bf16.msra.mxu0 %v778
    %1186 = vmatprep.subr.bf16.mxu0 0
    %1187 = vmatpush1.bf16.msra.mxu0 %v779
    %1188 = vmatprep.subr.bf16.mxu0 0
    %1189 = vmatpush1.bf16.msra.mxu0 %v780
    %1190 = vmatprep.subr.bf16.mxu0 0
    %1191 = vmatpush1.bf16.msra.mxu0 %v781
    %1192 = vmatprep.subr.bf16.mxu0 0
    %1193 = vmatpush1.bf16.msra.mxu0 %v782
    %1194 = vmatprep.subr.bf16.mxu0 0
    %1195 = vmatpush1.bf16.msra.mxu0 %v783
    %1196 = vmatprep.subr.bf16.mxu0 0
    %1197 = vmatpush1.bf16.msra.mxu0 %v784
    %1198 = vmatprep.subr.bf16.mxu0 0
    %1199 = vmatpush1.bf16.msra.mxu0 %v785
    %1200 = vmatprep.subr.bf16.mxu0 0
    %1201 = vmatpush1.bf16.msra.mxu0 %v786
    %1202 = vmatprep.subr.bf16.mxu0 0
    %1203 = vmatpush1.bf16.msra.mxu0 %v787
    %1204 = vmatprep.subr.bf16.mxu0 0
    %1205 = vmatpush1.bf16.msra.mxu0 %v788
    %1206 = vmatprep.subr.bf16.mxu0 0
    %1207 = vmatpush1.bf16.msra.mxu0 %v789
    %1208 = vmatprep.mubr.bf16.mxu0 %v292
    %1209 = vmatmul.mubr.bf16.gmra.mrb[0].mxu0 %v291
    %v1210 = vpop.f32.mrb[0].mxu0
    %v1211 = vadd.f32 %v1050, %v1210
    %v1212 = vpop.f32.mrb[0].mxu0
    %v1213 = vpop.f32.mrb[0].mxu0
    %v1214 = vadd.f32 %v1053, %v1213
    %v1215 = vpop.f32.mrb[0].mxu0
    %1216 = vmatprep.mubr.bf16.mxu0 %v299
    %1217 = vmatmul.mubr.bf16.gmra.mrb[0].mxu0 %v298
    %v1218 = vpop.f32.mrb[0].mxu0
    %v1219 = vadd.f32 %v1058, %v1218
    %v1220 = vpop.f32.mrb[0].mxu0
    %v1221 = vpop.f32.mrb[0].mxu0
    %v1222 = vadd.f32 %v1061, %v1221
    %v1223 = vpop.f32.mrb[0].mxu0
    %1224 = vmatprep.mubr.bf16.mxu0 %v306
    %1225 = vmatmul.mubr.bf16.gmra.mrb[0].mxu0 %v305
    %v1226 = vpop.f32.mrb[0].mxu0
    %v1227 = vadd.f32 %v1066, %v1226
    %v1228 = vpop.f32.mrb[0].mxu0
    %v1229 = vpop.f32.mrb[0].mxu0
    %v1230 = vadd.f32 %v1069, %v1229
    %v1231 = vpop.f32.mrb[0].mxu0
    %1232 = vmatprep.mubr.bf16.mxu0 %v313
    %1233 = vmatmul.mubr.bf16.gmra.mrb[0].mxu0 %v312
    %v1234 = vpop.f32.mrb[0].mxu0
    %v1235 = vadd.f32 %v1074, %v1234
    %v1236 = vpop.f32.mrb[0].mxu0
    %v1237 = vpop.f32.mrb[0].mxu0
    %v1238 = vadd.f32 %v1077, %v1237
    %v1239 = vpop.f32.mrb[0].mxu0
    %1240 = vmatprep.mubr.bf16.mxu0 %v320
    %1241 = vmatmul.mubr.bf16.gmra.mrb[0].mxu0 %v319
    %v1242 = vpop.f32.mrb[0].mxu0
    %v1243 = vadd.f32 %v1082, %v1242
    %v1244 = vpop.f32.mrb[0].mxu0
    %v1245 = vpop.f32.mrb[0].mxu0
    %v1246 = vadd.f32 %v1085, %v1245
    %v1247 = vpop.f32.mrb[0].mxu0
    %1248 = vmatprep.mubr.bf16.mxu0 %v327
    %1249 = vmatmul.mubr.bf16.gmra.mrb[0].mxu0 %v326
    %v1250 = vpop.f32.mrb[0].mxu0
    %v1251 = vadd.f32 %v1090, %v1250
    %v1252 = vpop.f32.mrb[0].mxu0
    %v1253 = vpop.f32.mrb[0].mxu0
    %v1254 = vadd.f32 %v1093, %v1253
    %v1255 = vpop.f32.mrb[0].mxu0
    %1256 = vmatprep.mubr.bf16.mxu0 %v334
    %1257 = vmatmul.mubr.bf16.gmra.mrb[0].mxu0 %v333
    %v1258 = vpop.f32.mrb[0].mxu0
    %v1259 = vadd.f32 %v1098, %v1258
    %v1260 = vpop.f32.mrb[0].mxu0
    %v1261 = vpop.f32.mrb[0].mxu0
    %v1262 = vadd.f32 %v1101, %v1261
    %v1263 = vpop.f32.mrb[0].mxu0
    %1264 = vmatprep.mubr.bf16.mxu0 %v341
    %1265 = vmatmul.mubr.bf16.gmra.mrb[0].mxu0 %v340
    %v1266 = vpop.f32.mrb[0].mxu0
    %v1267 = vadd.f32 %v1106, %v1266
    %v1268 = vpop.f32.mrb[0].mxu0
    %v1269 = vpop.f32.mrb[0].mxu0
    %v1270 = vadd.f32 %v1109, %v1269
    %v1271 = vpop.f32.mrb[0].mxu0
    %1272 = vmatprep.mubr.bf16.mxu0 %v348
    %1273 = vmatmul.mubr.bf16.gmra.mrb[0].mxu0 %v347
    %v1274 = vpop.f32.mrb[0].mxu0
    %v1275 = vadd.f32 %v1114, %v1274
    %v1276 = vpop.f32.mrb[0].mxu0
    %v1277 = vpop.f32.mrb[0].mxu0
    %v1278 = vadd.f32 %v1117, %v1277
    %v1279 = vpop.f32.mrb[0].mxu0
    %1280 = vmatprep.mubr.bf16.mxu0 %v355
    %1281 = vmatmul.mubr.bf16.gmra.mrb[0].mxu0 %v354
    %v1282 = vpop.f32.mrb[0].mxu0
    %v1283 = vadd.f32 %v1122, %v1282
    %v1284 = vpop.f32.mrb[0].mxu0
    %v1285 = vpop.f32.mrb[0].mxu0
    %v1286 = vadd.f32 %v1125, %v1285
    %v1287 = vpop.f32.mrb[0].mxu0
    %1288 = vmatprep.mubr.bf16.mxu0 %v362
    %1289 = vmatmul.mubr.bf16.gmra.mrb[0].mxu0 %v361
    %v1290 = vpop.f32.mrb[0].mxu0
    %v1291 = vadd.f32 %v1130, %v1290
    %v1292 = vpop.f32.mrb[0].mxu0
    %v1293 = vpop.f32.mrb[0].mxu0
    %v1294 = vadd.f32 %v1133, %v1293
    %v1295 = vpop.f32.mrb[0].mxu0
    %1296 = vmatprep.mubr.bf16.mxu0 %v369
    %1297 = vmatmul.mubr.bf16.gmra.mrb[0].mxu0 %v368
    %v1298 = vpop.f32.mrb[0].mxu0
    %v1299 = vadd.f32 %v1138, %v1298
    %v1300 = vpop.f32.mrb[0].mxu0
    %v1301 = vpop.f32.mrb[0].mxu0
    %v1302 = vadd.f32 %v1141, %v1301
    %v1303 = vpop.f32.mrb[0].mxu0
    %1304 = vmatprep.mubr.bf16.mxu0 %v376
    %1305 = vmatmul.mubr.bf16.gmra.mrb[0].mxu0 %v375
    %v1306 = vpop.f32.mrb[0].mxu0
    %v1307 = vadd.f32 %v1146, %v1306
    %v1308 = vpop.f32.mrb[0].mxu0
    %v1309 = vpop.f32.mrb[0].mxu0
    %v1310 = vadd.f32 %v1149, %v1309
    %v1311 = vpop.f32.mrb[0].mxu0
    %1312 = vmatprep.mubr.bf16.mxu0 %v383
    %1313 = vmatmul.mubr.bf16.gmra.mrb[0].mxu0 %v382
    %v1314 = vpop.f32.mrb[0].mxu0
    %v1315 = vadd.f32 %v1154, %v1314
    %v1316 = vpop.f32.mrb[0].mxu0
    %v1317 = vpop.f32.mrb[0].mxu0
    %v1318 = vadd.f32 %v1157, %v1317
    %v1319 = vpop.f32.mrb[0].mxu0
    %1320 = vmatprep.mubr.bf16.mxu0 %v390
    %1321 = vmatmul.mubr.bf16.gmra.mrb[0].mxu0 %v389
    %v1322 = vpop.f32.mrb[0].mxu0
    %v1323 = vadd.f32 %v1162, %v1322
    %v1324 = vpop.f32.mrb[0].mxu0
    %v1325 = vpop.f32.mrb[0].mxu0
    %v1326 = vadd.f32 %v1165, %v1325
    %v1327 = vpop.f32.mrb[0].mxu0
    %1328 = vmatprep.mubr.bf16.mxu0 %v397
    %1329 = vmatmul.mubr.bf16.gmra.mrb[0].mxu0 %v396
    %v1330 = vpop.f32.mrb[0].mxu0
    %v1331 = vadd.f32 %v1170, %v1330
    %v1332 = vpop.f32.mrb[0].mxu0
    %v1333 = vpop.f32.mrb[0].mxu0
    %v1334 = vadd.f32 %v1173, %v1333
    %v1335 = vpop.f32.mrb[0].mxu0
    %1336 = vdwg.mxu0
    %1337 = vmatprep.subr.bf16.mxu0 0
    %1338 = vmatpush1.bf16.msra.mxu0 %v790
    %1339 = vmatprep.subr.bf16.mxu0 0
    %1340 = vmatpush1.bf16.msra.mxu0 %v791
    %1341 = vmatprep.subr.bf16.mxu0 0
    %1342 = vmatpush1.bf16.msra.mxu0 %v792
    %1343 = vmatprep.subr.bf16.mxu0 0
    %1344 = vmatpush1.bf16.msra.mxu0 %v793
    %1345 = vmatprep.subr.bf16.mxu0 0
    %1346 = vmatpush1.bf16.msra.mxu0 %v794
    %1347 = vmatprep.subr.bf16.mxu0 0
    %1348 = vmatpush1.bf16.msra.mxu0 %v795
    %1349 = vmatprep.subr.bf16.mxu0 0
    %1350 = vmatpush1.bf16.msra.mxu0 %v796
    %1351 = vmatprep.subr.bf16.mxu0 0
    %1352 = vmatpush1.bf16.msra.mxu0 %v797
    %1353 = vmatprep.subr.bf16.mxu0 0
    %1354 = vmatpush1.bf16.msra.mxu0 0
    %1355 = vmatprep.subr.bf16.mxu0 0
    %1356 = vmatpush1.bf16.msra.mxu0 0
    %1357 = vmatprep.subr.bf16.mxu0 0
    %1358 = vmatpush1.bf16.msra.mxu0 0
    %1359 = vmatprep.subr.bf16.mxu0 0
    %1360 = vmatpush1.bf16.msra.mxu0 0
    %1361 = vmatprep.subr.bf16.mxu0 0
    %1362 = vmatpush1.bf16.msra.mxu0 0
    %1363 = vmatprep.subr.bf16.mxu0 0
    %1364 = vmatpush1.bf16.msra.mxu0 0
    %1365 = vmatprep.subr.bf16.mxu0 0
    %1366 = vmatpush1.bf16.msra.mxu0 0
    %1367 = vmatprep.subr.bf16.mxu0 0
    %1368 = vmatpush1.bf16.msra.mxu0 0
    %1369 = vmatprep.mubr.bf16.mxu0 0
    %1370 = vmatmul.mubr.bf16.gmra.mrb[0].mxu0 %v293
    %v1371 = vpop.f32.mrb[0].mxu0
    %v1372 = vadd.f32 %v1211, %v1371
    %v1373 = vpop.f32.mrb[0].mxu0
    %v1374 = vpop.f32.mrb[0].mxu0
    %v1375 = vadd.f32 %v1214, %v1374
    %v1376 = vpop.f32.mrb[0].mxu0
    %1377 = vmatprep.mubr.bf16.mxu0 0
    %1378 = vmatmul.mubr.bf16.gmra.mrb[0].mxu0 %v300
    %v1379 = vpop.f32.mrb[0].mxu0
    %v1380 = vadd.f32 %v1219, %v1379
    %v1381 = vpop.f32.mrb[0].mxu0
    %v1382 = vpop.f32.mrb[0].mxu0
    %v1383 = vadd.f32 %v1222, %v1382
    %v1384 = vpop.f32.mrb[0].mxu0
    %1385 = vmatprep.mubr.bf16.mxu0 0
    %1386 = vmatmul.mubr.bf16.gmra.mrb[0].mxu0 %v307
    %v1387 = vpop.f32.mrb[0].mxu0
    %v1388 = vadd.f32 %v1227, %v1387
    %v1389 = vpop.f32.mrb[0].mxu0
    %v1390 = vpop.f32.mrb[0].mxu0
    %v1391 = vadd.f32 %v1230, %v1390
    %v1392 = vpop.f32.mrb[0].mxu0
    %1393 = vmatprep.mubr.bf16.mxu0 0
    %1394 = vmatmul.mubr.bf16.gmra.mrb[0].mxu0 %v314
    %v1395 = vpop.f32.mrb[0].mxu0
    %v1396 = vadd.f32 %v1235, %v1395
    %v1397 = vpop.f32.mrb[0].mxu0
    %v1398 = vpop.f32.mrb[0].mxu0
    %v1399 = vadd.f32 %v1238, %v1398
    %v1400 = vpop.f32.mrb[0].mxu0
    %1401 = vmatprep.mubr.bf16.mxu0 0
    %1402 = vmatmul.mubr.bf16.gmra.mrb[0].mxu0 %v321
    %v1403 = vpop.f32.mrb[0].mxu0
    %v1404 = vadd.f32 %v1243, %v1403
    %v1405 = vpop.f32.mrb[0].mxu0
    %v1406 = vpop.f32.mrb[0].mxu0
    %v1407 = vadd.f32 %v1246, %v1406
    %v1408 = vpop.f32.mrb[0].mxu0
    %1409 = vmatprep.mubr.bf16.mxu0 0
    %1410 = vmatmul.mubr.bf16.gmra.mrb[0].mxu0 %v328
    %v1411 = vpop.f32.mrb[0].mxu0
    %v1412 = vadd.f32 %v1251, %v1411
    %v1413 = vpop.f32.mrb[0].mxu0
    %v1414 = vpop.f32.mrb[0].mxu0
    %v1415 = vadd.f32 %v1254, %v1414
    %v1416 = vpop.f32.mrb[0].mxu0
    %1417 = vmatprep.mubr.bf16.mxu0 0
    %1418 = vmatmul.mubr.bf16.gmra.mrb[0].mxu0 %v335
    %v1419 = vpop.f32.mrb[0].mxu0
    %v1420 = vadd.f32 %v1259, %v1419
    %v1421 = vpop.f32.mrb[0].mxu0
    %v1422 = vpop.f32.mrb[0].mxu0
    %v1423 = vadd.f32 %v1262, %v1422
    %v1424 = vpop.f32.mrb[0].mxu0
    %1425 = vmatprep.mubr.bf16.mxu0 0
    %1426 = vmatmul.mubr.bf16.gmra.mrb[0].mxu0 %v342
    %v1427 = vpop.f32.mrb[0].mxu0
    %v1428 = vadd.f32 %v1267, %v1427
    %v1429 = vpop.f32.mrb[0].mxu0
    %v1430 = vpop.f32.mrb[0].mxu0
    %v1431 = vadd.f32 %v1270, %v1430
    %v1432 = vpop.f32.mrb[0].mxu0
    %1433 = vmatprep.mubr.bf16.mxu0 0
    %1434 = vmatmul.mubr.bf16.gmra.mrb[0].mxu0 %v349
    %v1435 = vpop.f32.mrb[0].mxu0
    %v1436 = vadd.f32 %v1275, %v1435
    %v1437 = vpop.f32.mrb[0].mxu0
    %v1438 = vpop.f32.mrb[0].mxu0
    %v1439 = vadd.f32 %v1278, %v1438
    %v1440 = vpop.f32.mrb[0].mxu0
    %1441 = vmatprep.mubr.bf16.mxu0 0
    %1442 = vmatmul.mubr.bf16.gmra.mrb[0].mxu0 %v356
    %v1443 = vpop.f32.mrb[0].mxu0
    %v1444 = vadd.f32 %v1283, %v1443
    %v1445 = vpop.f32.mrb[0].mxu0
    %v1446 = vpop.f32.mrb[0].mxu0
    %v1447 = vadd.f32 %v1286, %v1446
    %v1448 = vpop.f32.mrb[0].mxu0
    %1449 = vmatprep.mubr.bf16.mxu0 0
    %1450 = vmatmul.mubr.bf16.gmra.mrb[0].mxu0 %v363
    %v1451 = vpop.f32.mrb[0].mxu0
    %v1452 = vadd.f32 %v1291, %v1451
    %v1453 = vpop.f32.mrb[0].mxu0
    %v1454 = vpop.f32.mrb[0].mxu0
    %v1455 = vadd.f32 %v1294, %v1454
    %v1456 = vpop.f32.mrb[0].mxu0
    %1457 = vmatprep.mubr.bf16.mxu0 0
    %1458 = vmatmul.mubr.bf16.gmra.mrb[0].mxu0 %v370
    %v1459 = vpop.f32.mrb[0].mxu0
    %v1460 = vadd.f32 %v1299, %v1459
    %v1461 = vpop.f32.mrb[0].mxu0
    %v1462 = vpop.f32.mrb[0].mxu0
    %v1463 = vadd.f32 %v1302, %v1462
    %v1464 = vpop.f32.mrb[0].mxu0
    %1465 = vmatprep.mubr.bf16.mxu0 0
    %1466 = vmatmul.mubr.bf16.gmra.mrb[0].mxu0 %v377
    %v1467 = vpop.f32.mrb[0].mxu0
    %v1468 = vadd.f32 %v1307, %v1467
    %v1469 = vpop.f32.mrb[0].mxu0
    %v1470 = vpop.f32.mrb[0].mxu0
    %v1471 = vadd.f32 %v1310, %v1470
    %v1472 = vpop.f32.mrb[0].mxu0
    %1473 = vmatprep.mubr.bf16.mxu0 0
    %1474 = vmatmul.mubr.bf16.gmra.mrb[0].mxu0 %v384
    %v1475 = vpop.f32.mrb[0].mxu0
    %v1476 = vadd.f32 %v1315, %v1475
    %v1477 = vpop.f32.mrb[0].mxu0
    %v1478 = vpop.f32.mrb[0].mxu0
    %v1479 = vadd.f32 %v1318, %v1478
    %v1480 = vpop.f32.mrb[0].mxu0
    %1481 = vmatprep.mubr.bf16.mxu0 0
    %1482 = vmatmul.mubr.bf16.gmra.mrb[0].mxu0 %v391
    %v1483 = vpop.f32.mrb[0].mxu0
    %v1484 = vadd.f32 %v1323, %v1483
    %v1485 = vpop.f32.mrb[0].mxu0
    %v1486 = vpop.f32.mrb[0].mxu0
    %v1487 = vadd.f32 %v1326, %v1486
    %v1488 = vpop.f32.mrb[0].mxu0
    %1489 = vmatprep.mubr.bf16.mxu0 0
    %1490 = vmatmul.mubr.bf16.gmra.mrb[0].mxu0 %v398
    %v1491 = vpop.f32.mrb[0].mxu0
    %v1492 = vadd.f32 %v1331, %v1491
    %v1493 = vpop.f32.mrb[0].mxu0
    %v1494 = vpop.f32.mrb[0].mxu0
    %v1495 = vadd.f32 %v1334, %v1494
    %v1496 = vpop.f32.mrb[0].mxu0
    %1497 = vdwg.mxu0
    %v1498 = vmul.f32 %v1372, 0.2
    %v1499 = vmul.f32 %v1375, 0.2
    %v1500 = vmul.f32 %v1380, 0.2
    %v1501 = vmul.f32 %v1383, 0.2
    %v1502 = vmul.f32 %v1388, 0.2
    %v1503 = vmul.f32 %v1391, 0.2
    %v1504 = vmul.f32 %v1396, 0.2
    %v1505 = vmul.f32 %v1399, 0.2
    %v1506 = vmul.f32 %v1404, 0.2
    %v1507 = vmul.f32 %v1407, 0.2
    %v1508 = vmul.f32 %v1412, 0.2
    %v1509 = vmul.f32 %v1415, 0.2
    %v1510 = vmul.f32 %v1420, 0.2
    %v1511 = vmul.f32 %v1423, 0.2
    %v1512 = vmul.f32 %v1428, 0.2
    %v1513 = vmul.f32 %v1431, 0.2
    %v1514 = vmul.f32 %v1436, 0.2
    %v1515 = vmul.f32 %v1439, 0.2
    %v1516 = vmul.f32 %v1444, 0.2
    %v1517 = vmul.f32 %v1447, 0.2
    %v1518 = vmul.f32 %v1452, 0.2
    %v1519 = vmul.f32 %v1455, 0.2
    %v1520 = vmul.f32 %v1460, 0.2
    %v1521 = vmul.f32 %v1463, 0.2
    %v1522 = vmul.f32 %v1468, 0.2
    %v1523 = vmul.f32 %v1471, 0.2
    %v1524 = vmul.f32 %v1476, 0.2
    %v1525 = vmul.f32 %v1479, 0.2
    %v1526 = vmul.f32 %v1484, 0.2
    %v1527 = vmul.f32 %v1487, 0.2
    %v1528 = vmul.f32 %v1492, 0.2
    %v1529 = vmul.f32 %v1495, 0.2
    %v1530 = vmax.f32 %v1372, %v1498
    %v1531 = vmax.f32 %v1375, %v1499
    %v1532 = vmax.f32 %v1380, %v1500
    %v1533 = vmax.f32 %v1383, %v1501
    %v1534 = vmax.f32 %v1388, %v1502
    %v1535 = vmax.f32 %v1391, %v1503
    %v1536 = vmax.f32 %v1396, %v1504
    %v1537 = vmax.f32 %v1399, %v1505
    %v1538 = vmax.f32 %v1404, %v1506
    %v1539 = vmax.f32 %v1407, %v1507
    %v1540 = vmax.f32 %v1412, %v1508
    %v1541 = vmax.f32 %v1415, %v1509
    %v1542 = vmax.f32 %v1420, %v1510
    %v1543 = vmax.f32 %v1423, %v1511
    %v1544 = vmax.f32 %v1428, %v1512
    %v1545 = vmax.f32 %v1431, %v1513
    %v1546 = vmax.f32 %v1436, %v1514
    %v1547 = vmax.f32 %v1439, %v1515
    %v1548 = vmax.f32 %v1444, %v1516
    %v1549 = vmax.f32 %v1447, %v1517
    %v1550 = vmax.f32 %v1452, %v1518
    %v1551 = vmax.f32 %v1455, %v1519
    %v1552 = vmax.f32 %v1460, %v1520
    %v1553 = vmax.f32 %v1463, %v1521
    %v1554 = vmax.f32 %v1468, %v1522
    %v1555 = vmax.f32 %v1471, %v1523
    %v1556 = vmax.f32 %v1476, %v1524
    %v1557 = vmax.f32 %v1479, %v1525
    %v1558 = vmax.f32 %v1484, %v1526
    %v1559 = vmax.f32 %v1487, %v1527
    %v1560 = vmax.f32 %v1492, %v1528
    %v1561 = vmax.f32 %v1495, %v1529
    %v1562 = vpack.c.bf16 %v1531, %v1530
    %v1563 = vpack.c.bf16 %v1533, %v1532
    %v1564 = vpack.c.bf16 %v1535, %v1534
    %v1565 = vpack.c.bf16 %v1537, %v1536
    %v1566 = vpack.c.bf16 %v1539, %v1538
    %v1567 = vpack.c.bf16 %v1541, %v1540
    %v1568 = vpack.c.bf16 %v1543, %v1542
    %v1569 = vpack.c.bf16 %v1545, %v1544
    %v1570 = vpack.c.bf16 %v1547, %v1546
    %v1571 = vpack.c.bf16 %v1549, %v1548
    %v1572 = vpack.c.bf16 %v1551, %v1550
    %v1573 = vpack.c.bf16 %v1553, %v1552
    %v1574 = vpack.c.bf16 %v1555, %v1554
    %v1575 = vpack.c.bf16 %v1557, %v1556
    %v1576 = vpack.c.bf16 %v1559, %v1558
    %v1577 = vpack.c.bf16 %v1561, %v1560
    %v1578 = vld [vmem:[%s3] sm:$0xf]
    %v1579 = vld [vmem:[%s3 + $0x4] sm:$0xf]
    %v1580 = vld [vmem:[%s3 + $0x8] sm:$0xf]
    %v1581 = vld [vmem:[%s3 + $0xc] sm:$0xf]
    %v1582 = vld [vmem:[%s3 + $0x10] sm:$0xf]
    %v1583 = vld [vmem:[%s3 + $0x14] sm:$0xf]
    %v1584 = vld [vmem:[%s3 + $0x18] sm:$0xf]
    %v1585 = vld [vmem:[%s3 + $0x1c] sm:$0xf]
    %v1586 = vld [vmem:[%s3 + $0x20] sm:$0xf]
    %v1587 = vld [vmem:[%s3 + $0x24] sm:$0xf]
    %v1588 = vld [vmem:[%s3 + $0x28] sm:$0xf]
    %v1589 = vld [vmem:[%s3 + $0x2c] sm:$0xf]
    %v1590 = vld [vmem:[%s3 + $0x30] sm:$0xf]
    %v1591 = vld [vmem:[%s3 + $0x34] sm:$0xf]
    %v1592 = vld [vmem:[%s3 + $0x38] sm:$0xf]
    %v1593 = vld [vmem:[%s3 + $0x3c] sm:$0xf]
    %v1594 = vld [vmem:[%s4] sm:$0x1]
    %v1596 = vlaneseq
    %v1597 = vshrl.u32 %v1596, 7
    %v1598 = vsub.s32 0, %v1597
    %v1599 = vrot.slane %v1594, %v1598
    %v1617 = vunpack.c.l.b16 %v1578
    %v1618 = vunpack.c.l.b16 %v1579
    %v1619 = vunpack.c.l.b16 %v1580
    %v1620 = vunpack.c.l.b16 %v1581
    %v1621 = vunpack.c.l.b16 %v1582
    %v1622 = vunpack.c.l.b16 %v1583
    %v1623 = vunpack.c.l.b16 %v1584
    %v1624 = vunpack.c.l.b16 %v1585
    %v1625 = vunpack.c.l.b16 %v1586
    %v1626 = vunpack.c.l.b16 %v1587
    %v1627 = vunpack.c.l.b16 %v1588
    %v1628 = vunpack.c.l.b16 %v1589
    %v1629 = vunpack.c.l.b16 %v1590
    %v1630 = vunpack.c.l.b16 %v1591
    %v1631 = vunpack.c.l.b16 %v1592
    %v1632 = vunpack.c.l.b16 %v1593
    %v1633 = vpack.c.b16 %v1618, %v1617
    %v1634 = vpack.c.b16 %v1620, %v1619
    %v1635 = vpack.c.b16 %v1622, %v1621
    %v1636 = vpack.c.b16 %v1624, %v1623
    %v1637 = vpack.c.b16 %v1626, %v1625
    %v1638 = vpack.c.b16 %v1628, %v1627
    %v1639 = vpack.c.b16 %v1630, %v1629
    %v1640 = vpack.c.b16 %v1632, %v1631
    %1649 = vmatprep.subr.bf16.mxu0 0
    %1650 = vmatpush1.bf16.msra.mxu0 %v1633
    %1651 = vmatprep.subr.bf16.mxu0 0
    %1652 = vmatpush1.bf16.msra.mxu0 %v1634
    %1653 = vmatprep.subr.bf16.mxu0 0
    %1654 = vmatpush1.bf16.msra.mxu0 %v1635
    %1655 = vmatprep.subr.bf16.mxu0 0
    %1656 = vmatpush1.bf16.msra.mxu0 %v1636
    %1657 = vmatprep.subr.bf16.mxu0 0
    %1658 = vmatpush1.bf16.msra.mxu0 %v1637
    %1659 = vmatprep.subr.bf16.mxu0 0
    %1660 = vmatpush1.bf16.msra.mxu0 %v1638
    %1661 = vmatprep.subr.bf16.mxu0 0
    %1662 = vmatpush1.bf16.msra.mxu0 %v1639
    %1663 = vmatprep.subr.bf16.mxu0 0
    %1664 = vmatpush1.bf16.msra.mxu0 %v1640
    %1665 = vmatprep.subr.bf16.mxu0 0
    %1666 = vmatpush1.bf16.msra.mxu0 0
    %1667 = vmatprep.subr.bf16.mxu0 0
    %1668 = vmatpush1.bf16.msra.mxu0 0
    %1669 = vmatprep.subr.bf16.mxu0 0
    %1670 = vmatpush1.bf16.msra.mxu0 0
    %1671 = vmatprep.subr.bf16.mxu0 0
    %1672 = vmatpush1.bf16.msra.mxu0 0
    %1673 = vmatprep.subr.bf16.mxu0 0
    %1674 = vmatpush1.bf16.msra.mxu0 0
    %1675 = vmatprep.subr.bf16.mxu0 0
    %1676 = vmatpush1.bf16.msra.mxu0 0
    %1677 = vmatprep.subr.bf16.mxu0 0
    %1678 = vmatpush1.bf16.msra.mxu0 0
    %1679 = vmatprep.subr.bf16.mxu0 0
    %1680 = vmatpush1.bf16.msra.mxu0 0
    %1681 = vmatprep.mubr.bf16.mxu0 0
    %1682 = vmatmul.mubr.bf16.gmra.mrb[0].mxu0 %v1562
    %v1683 = vpop.f32.mrb[0].mxu0
    %v1684 = vadd.f32 %v1599, %v1683
    %v1685 = vpop.f32.mrb[0].mxu0
    %v1686 = vpop.f32.mrb[0].mxu0
    %v1687 = vadd.f32 %v1599, %v1686
    %v1688 = vpop.f32.mrb[0].mxu0
    %1689 = vmatprep.mubr.bf16.mxu0 0
    %1690 = vmatmul.mubr.bf16.gmra.mrb[0].mxu0 %v1563
    %v1691 = vpop.f32.mrb[0].mxu0
    %v1692 = vadd.f32 %v1599, %v1691
    %v1693 = vpop.f32.mrb[0].mxu0
    %v1694 = vpop.f32.mrb[0].mxu0
    %v1695 = vadd.f32 %v1599, %v1694
    %v1696 = vpop.f32.mrb[0].mxu0
    %1697 = vmatprep.mubr.bf16.mxu0 0
    %1698 = vmatmul.mubr.bf16.gmra.mrb[0].mxu0 %v1564
    %v1699 = vpop.f32.mrb[0].mxu0
    %v1700 = vadd.f32 %v1599, %v1699
    %v1701 = vpop.f32.mrb[0].mxu0
    %v1702 = vpop.f32.mrb[0].mxu0
    %v1703 = vadd.f32 %v1599, %v1702
    %v1704 = vpop.f32.mrb[0].mxu0
    %1705 = vmatprep.mubr.bf16.mxu0 0
    %1706 = vmatmul.mubr.bf16.gmra.mrb[0].mxu0 %v1565
    %v1707 = vpop.f32.mrb[0].mxu0
    %v1708 = vadd.f32 %v1599, %v1707
    %v1709 = vpop.f32.mrb[0].mxu0
    %v1710 = vpop.f32.mrb[0].mxu0
    %v1711 = vadd.f32 %v1599, %v1710
    %v1712 = vpop.f32.mrb[0].mxu0
    %1713 = vmatprep.mubr.bf16.mxu0 0
    %1714 = vmatmul.mubr.bf16.gmra.mrb[0].mxu0 %v1566
    %v1715 = vpop.f32.mrb[0].mxu0
    %v1716 = vadd.f32 %v1599, %v1715
    %v1717 = vpop.f32.mrb[0].mxu0
    %v1718 = vpop.f32.mrb[0].mxu0
    %v1719 = vadd.f32 %v1599, %v1718
    %v1720 = vpop.f32.mrb[0].mxu0
    %1721 = vmatprep.mubr.bf16.mxu0 0
    %1722 = vmatmul.mubr.bf16.gmra.mrb[0].mxu0 %v1567
    %v1723 = vpop.f32.mrb[0].mxu0
    %v1724 = vadd.f32 %v1599, %v1723
    %v1725 = vpop.f32.mrb[0].mxu0
    %v1726 = vpop.f32.mrb[0].mxu0
    %v1727 = vadd.f32 %v1599, %v1726
    %v1728 = vpop.f32.mrb[0].mxu0
    %1729 = vmatprep.mubr.bf16.mxu0 0
    %1730 = vmatmul.mubr.bf16.gmra.mrb[0].mxu0 %v1568
    %v1731 = vpop.f32.mrb[0].mxu0
    %v1732 = vadd.f32 %v1599, %v1731
    %v1733 = vpop.f32.mrb[0].mxu0
    %v1734 = vpop.f32.mrb[0].mxu0
    %v1735 = vadd.f32 %v1599, %v1734
    %v1736 = vpop.f32.mrb[0].mxu0
    %1737 = vmatprep.mubr.bf16.mxu0 0
    %1738 = vmatmul.mubr.bf16.gmra.mrb[0].mxu0 %v1569
    %v1739 = vpop.f32.mrb[0].mxu0
    %v1740 = vadd.f32 %v1599, %v1739
    %v1741 = vpop.f32.mrb[0].mxu0
    %v1742 = vpop.f32.mrb[0].mxu0
    %v1743 = vadd.f32 %v1599, %v1742
    %v1744 = vpop.f32.mrb[0].mxu0
    %1745 = vmatprep.mubr.bf16.mxu0 0
    %1746 = vmatmul.mubr.bf16.gmra.mrb[0].mxu0 %v1570
    %v1747 = vpop.f32.mrb[0].mxu0
    %v1748 = vadd.f32 %v1599, %v1747
    %v1749 = vpop.f32.mrb[0].mxu0
    %v1750 = vpop.f32.mrb[0].mxu0
    %v1751 = vadd.f32 %v1599, %v1750
    %v1752 = vpop.f32.mrb[0].mxu0
    %1753 = vmatprep.mubr.bf16.mxu0 0
    %1754 = vmatmul.mubr.bf16.gmra.mrb[0].mxu0 %v1571
    %v1755 = vpop.f32.mrb[0].mxu0
    %v1756 = vadd.f32 %v1599, %v1755
    %v1757 = vpop.f32.mrb[0].mxu0
    %v1758 = vpop.f32.mrb[0].mxu0
    %v1759 = vadd.f32 %v1599, %v1758
    %v1760 = vpop.f32.mrb[0].mxu0
    %1761 = vmatprep.mubr.bf16.mxu0 0
    %1762 = vmatmul.mubr.bf16.gmra.mrb[0].mxu0 %v1572
    %v1763 = vpop.f32.mrb[0].mxu0
    %v1764 = vadd.f32 %v1599, %v1763
    %v1765 = vpop.f32.mrb[0].mxu0
    %v1766 = vpop.f32.mrb[0].mxu0
    %v1767 = vadd.f32 %v1599, %v1766
    %v1768 = vpop.f32.mrb[0].mxu0
    %1769 = vmatprep.mubr.bf16.mxu0 0
    %1770 = vmatmul.mubr.bf16.gmra.mrb[0].mxu0 %v1573
    %v1771 = vpop.f32.mrb[0].mxu0
    %v1772 = vadd.f32 %v1599, %v1771
    %v1773 = vpop.f32.mrb[0].mxu0
    %v1774 = vpop.f32.mrb[0].mxu0
    %v1775 = vadd.f32 %v1599, %v1774
    %v1776 = vpop.f32.mrb[0].mxu0
    %1777 = vmatprep.mubr.bf16.mxu0 0
    %1778 = vmatmul.mubr.bf16.gmra.mrb[0].mxu0 %v1574
    %v1779 = vpop.f32.mrb[0].mxu0
    %v1780 = vadd.f32 %v1599, %v1779
    %v1781 = vpop.f32.mrb[0].mxu0
    %v1782 = vpop.f32.mrb[0].mxu0
    %v1783 = vadd.f32 %v1599, %v1782
    %v1784 = vpop.f32.mrb[0].mxu0
    %1785 = vmatprep.mubr.bf16.mxu0 0
    %1786 = vmatmul.mubr.bf16.gmra.mrb[0].mxu0 %v1575
    %v1787 = vpop.f32.mrb[0].mxu0
    %v1788 = vadd.f32 %v1599, %v1787
    %v1789 = vpop.f32.mrb[0].mxu0
    %v1790 = vpop.f32.mrb[0].mxu0
    %v1791 = vadd.f32 %v1599, %v1790
    %v1792 = vpop.f32.mrb[0].mxu0
    %1793 = vmatprep.mubr.bf16.mxu0 0
    %1794 = vmatmul.mubr.bf16.gmra.mrb[0].mxu0 %v1576
    %v1795 = vpop.f32.mrb[0].mxu0
    %v1796 = vadd.f32 %v1599, %v1795
    %v1797 = vpop.f32.mrb[0].mxu0
    %v1798 = vpop.f32.mrb[0].mxu0
    %v1799 = vadd.f32 %v1599, %v1798
    %v1800 = vpop.f32.mrb[0].mxu0
    %1801 = vmatprep.mubr.bf16.mxu0 0
    %1802 = vmatmul.mubr.bf16.gmra.mrb[0].mxu0 %v1577
    %v1803 = vpop.f32.mrb[0].mxu0
    %v1804 = vadd.f32 %v1599, %v1803
    %v1805 = vpop.f32.mrb[0].mxu0
    %v1806 = vpop.f32.mrb[0].mxu0
    %v1807 = vadd.f32 %v1599, %v1806
    %v1808 = vpop.f32.mrb[0].mxu0
    %1809 = vdwg.mxu0
    %v1810 = vmul.f32 %v1684, 0.2
    %v1811 = vmul.f32 %v1687, 0.2
    %v1812 = vmul.f32 %v1692, 0.2
    %v1813 = vmul.f32 %v1695, 0.2
    %v1814 = vmul.f32 %v1700, 0.2
    %v1815 = vmul.f32 %v1703, 0.2
    %v1816 = vmul.f32 %v1708, 0.2
    %v1817 = vmul.f32 %v1711, 0.2
    %v1818 = vmul.f32 %v1716, 0.2
    %v1819 = vmul.f32 %v1719, 0.2
    %v1820 = vmul.f32 %v1724, 0.2
    %v1821 = vmul.f32 %v1727, 0.2
    %v1822 = vmul.f32 %v1732, 0.2
    %v1823 = vmul.f32 %v1735, 0.2
    %v1824 = vmul.f32 %v1740, 0.2
    %v1825 = vmul.f32 %v1743, 0.2
    %v1826 = vmul.f32 %v1748, 0.2
    %v1827 = vmul.f32 %v1751, 0.2
    %v1828 = vmul.f32 %v1756, 0.2
    %v1829 = vmul.f32 %v1759, 0.2
    %v1830 = vmul.f32 %v1764, 0.2
    %v1831 = vmul.f32 %v1767, 0.2
    %v1832 = vmul.f32 %v1772, 0.2
    %v1833 = vmul.f32 %v1775, 0.2
    %v1834 = vmul.f32 %v1780, 0.2
    %v1835 = vmul.f32 %v1783, 0.2
    %v1836 = vmul.f32 %v1788, 0.2
    %v1837 = vmul.f32 %v1791, 0.2
    %v1838 = vmul.f32 %v1796, 0.2
    %v1839 = vmul.f32 %v1799, 0.2
    %v1840 = vmul.f32 %v1804, 0.2
    %v1841 = vmul.f32 %v1807, 0.2
    %v1842 = vmax.f32 %v1684, %v1810
    %v1843 = vmax.f32 %v1687, %v1811
    %v1844 = vmax.f32 %v1692, %v1812
    %v1845 = vmax.f32 %v1695, %v1813
    %v1846 = vmax.f32 %v1700, %v1814
    %v1847 = vmax.f32 %v1703, %v1815
    %v1848 = vmax.f32 %v1708, %v1816
    %v1849 = vmax.f32 %v1711, %v1817
    %v1850 = vmax.f32 %v1716, %v1818
    %v1851 = vmax.f32 %v1719, %v1819
    %v1852 = vmax.f32 %v1724, %v1820
    %v1853 = vmax.f32 %v1727, %v1821
    %v1854 = vmax.f32 %v1732, %v1822
    %v1855 = vmax.f32 %v1735, %v1823
    %v1856 = vmax.f32 %v1740, %v1824
    %v1857 = vmax.f32 %v1743, %v1825
    %v1858 = vmax.f32 %v1748, %v1826
    %v1859 = vmax.f32 %v1751, %v1827
    %v1860 = vmax.f32 %v1756, %v1828
    %v1861 = vmax.f32 %v1759, %v1829
    %v1862 = vmax.f32 %v1764, %v1830
    %v1863 = vmax.f32 %v1767, %v1831
    %v1864 = vmax.f32 %v1772, %v1832
    %v1865 = vmax.f32 %v1775, %v1833
    %v1866 = vmax.f32 %v1780, %v1834
    %v1867 = vmax.f32 %v1783, %v1835
    %v1868 = vmax.f32 %v1788, %v1836
    %v1869 = vmax.f32 %v1791, %v1837
    %v1870 = vmax.f32 %v1796, %v1838
    %v1871 = vmax.f32 %v1799, %v1839
    %v1872 = vmax.f32 %v1804, %v1840
    %v1873 = vmax.f32 %v1807, %v1841
    %v1874 = vpack.c.bf16 %v1843, %v1842
    %v1875 = vpack.c.bf16 %v1845, %v1844
    %v1876 = vpack.c.bf16 %v1847, %v1846
    %v1877 = vpack.c.bf16 %v1849, %v1848
    %v1878 = vpack.c.bf16 %v1851, %v1850
    %v1879 = vpack.c.bf16 %v1853, %v1852
    %v1880 = vpack.c.bf16 %v1855, %v1854
    %v1881 = vpack.c.bf16 %v1857, %v1856
    %v1882 = vpack.c.bf16 %v1859, %v1858
    %v1883 = vpack.c.bf16 %v1861, %v1860
    %v1884 = vpack.c.bf16 %v1863, %v1862
    %v1885 = vpack.c.bf16 %v1865, %v1864
    %v1886 = vpack.c.bf16 %v1867, %v1866
    %v1887 = vpack.c.bf16 %v1869, %v1868
    %v1888 = vpack.c.bf16 %v1871, %v1870
    %v1889 = vpack.c.bf16 %v1873, %v1872
    %v1890 = vld [vmem:[%s5] sm:$0xf]
    %v1891 = vld [vmem:[%s5 + $0x4] sm:$0xf]
    %v1892 = vld [vmem:[%s5 + $0x8] sm:$0xf]
    %v1893 = vld [vmem:[%s5 + $0xc] sm:$0xf]
    %v1894 = vld [vmem:[%s5 + $0x10] sm:$0xf]
    %v1895 = vld [vmem:[%s5 + $0x14] sm:$0xf]
    %v1896 = vld [vmem:[%s5 + $0x18] sm:$0xf]
    %v1897 = vld [vmem:[%s5 + $0x1c] sm:$0xf]
    %v1898 = vld [vmem:[%s6] sm:$0x1]
    %v1900 = vlaneseq
    %v1901 = vshrl.u32 %v1900, 7
    %v1902 = vsub.s32 0, %v1901
    %v1903 = vrot.slane %v1898, %v1902
    %v1913 = vunpack.c.l.b16 %v1890
    %v1914 = vunpack.c.l.b16 %v1891
    %v1915 = vunpack.c.l.b16 %v1892
    %v1916 = vunpack.c.l.b16 %v1893
    %v1917 = vunpack.c.l.b16 %v1894
    %v1918 = vunpack.c.l.b16 %v1895
    %v1919 = vunpack.c.l.b16 %v1896
    %v1920 = vunpack.c.l.b16 %v1897
    %v1921 = vpack.c.b16 %v1914, %v1913
    %v1922 = vpack.c.b16 %v1916, %v1915
    %v1923 = vpack.c.b16 %v1918, %v1917
    %v1924 = vpack.c.b16 %v1920, %v1919
    %vm1929 = vcmask 523264
    %v1931 = vsel %vm1929, %v1874, 0
    %v1934 = vsel %vm1929, %v1875, 0
    %v1937 = vsel %vm1929, %v1876, 0
    %v1940 = vsel %vm1929, %v1877, 0
    %v1943 = vsel %vm1929, %v1878, 0
    %v1946 = vsel %vm1929, %v1879, 0
    %v1949 = vsel %vm1929, %v1880, 0
    %v1952 = vsel %vm1929, %v1881, 0
    %v1955 = vsel %vm1929, %v1882, 0
    %v1958 = vsel %vm1929, %v1883, 0
    %v1961 = vsel %vm1929, %v1884, 0
    %v1964 = vsel %vm1929, %v1885, 0
    %v1967 = vsel %vm1929, %v1886, 0
    %v1970 = vsel %vm1929, %v1887, 0
    %v1973 = vsel %vm1929, %v1888, 0
    %v1976 = vsel %vm1929, %v1889, 0
    %1978 = vmatprep.subr.bf16.mxu0 0
    %1979 = vmatpush1.bf16.msra.mxu0 %v1921
    %1980 = vmatprep.subr.bf16.mxu0 0
    %1981 = vmatpush1.bf16.msra.mxu0 %v1922
    %1982 = vmatprep.subr.bf16.mxu0 0
    %1983 = vmatpush1.bf16.msra.mxu0 %v1923
    %1984 = vmatprep.subr.bf16.mxu0 0
    %1985 = vmatpush1.bf16.msra.mxu0 %v1924
    %1986 = vmatprep.subr.bf16.mxu0 0
    %1987 = vmatpush1.bf16.msra.mxu0 0
    %1988 = vmatprep.subr.bf16.mxu0 0
    %1989 = vmatpush1.bf16.msra.mxu0 0
    %1990 = vmatprep.subr.bf16.mxu0 0
    %1991 = vmatpush1.bf16.msra.mxu0 0
    %1992 = vmatprep.subr.bf16.mxu0 0
    %1993 = vmatpush1.bf16.msra.mxu0 0
    %1994 = vmatprep.subr.bf16.mxu0 0
    %1995 = vmatpush1.bf16.msra.mxu0 0
    %1996 = vmatprep.subr.bf16.mxu0 0
    %1997 = vmatpush1.bf16.msra.mxu0 0
    %1998 = vmatprep.subr.bf16.mxu0 0
    %1999 = vmatpush1.bf16.msra.mxu0 0
    %2000 = vmatprep.subr.bf16.mxu0 0
    %2001 = vmatpush1.bf16.msra.mxu0 0
    %2002 = vmatprep.subr.bf16.mxu0 0
    %2003 = vmatpush1.bf16.msra.mxu0 0
    %2004 = vmatprep.subr.bf16.mxu0 0
    %2005 = vmatpush1.bf16.msra.mxu0 0
    %2006 = vmatprep.subr.bf16.mxu0 0
    %2007 = vmatpush1.bf16.msra.mxu0 0
    %2008 = vmatprep.subr.bf16.mxu0 0
    %2009 = vmatpush1.bf16.msra.mxu0 0
    %2010 = vmatprep.mubr.bf16.mxu0 0
    %2011 = vmatmul.mubr.bf16.gmra.mrb[0].mxu0 %v1931
    %v2012 = vpop.f32.mrb[0].mxu0
    %v2013 = vadd.f32 %v1903, %v2012
    %v2014 = vpop.f32.mrb[0].mxu0
    %v2015 = vpop.f32.mrb[0].mxu0
    %v2016 = vadd.f32 %v1903, %v2015
    %v2017 = vpop.f32.mrb[0].mxu0
    %2018 = vmatprep.mubr.bf16.mxu0 0
    %2019 = vmatmul.mubr.bf16.gmra.mrb[0].mxu0 %v1934
    %v2020 = vpop.f32.mrb[0].mxu0
    %v2021 = vadd.f32 %v1903, %v2020
    %v2022 = vpop.f32.mrb[0].mxu0
    %v2023 = vpop.f32.mrb[0].mxu0
    %v2024 = vadd.f32 %v1903, %v2023
    %v2025 = vpop.f32.mrb[0].mxu0
    %2026 = vmatprep.mubr.bf16.mxu0 0
    %2027 = vmatmul.mubr.bf16.gmra.mrb[0].mxu0 %v1937
    %v2028 = vpop.f32.mrb[0].mxu0
    %v2029 = vadd.f32 %v1903, %v2028
    %v2030 = vpop.f32.mrb[0].mxu0
    %v2031 = vpop.f32.mrb[0].mxu0
    %v2032 = vadd.f32 %v1903, %v2031
    %v2033 = vpop.f32.mrb[0].mxu0
    %2034 = vmatprep.mubr.bf16.mxu0 0
    %2035 = vmatmul.mubr.bf16.gmra.mrb[0].mxu0 %v1940
    %v2036 = vpop.f32.mrb[0].mxu0
    %v2037 = vadd.f32 %v1903, %v2036
    %v2038 = vpop.f32.mrb[0].mxu0
    %v2039 = vpop.f32.mrb[0].mxu0
    %v2040 = vadd.f32 %v1903, %v2039
    %v2041 = vpop.f32.mrb[0].mxu0
    %2042 = vmatprep.mubr.bf16.mxu0 0
    %2043 = vmatmul.mubr.bf16.gmra.mrb[0].mxu0 %v1943
    %v2044 = vpop.f32.mrb[0].mxu0
    %v2045 = vadd.f32 %v1903, %v2044
    %v2046 = vpop.f32.mrb[0].mxu0
    %v2047 = vpop.f32.mrb[0].mxu0
    %v2048 = vadd.f32 %v1903, %v2047
    %v2049 = vpop.f32.mrb[0].mxu0
    %2050 = vmatprep.mubr.bf16.mxu0 0
    %2051 = vmatmul.mubr.bf16.gmra.mrb[0].mxu0 %v1946
    %v2052 = vpop.f32.mrb[0].mxu0
    %v2053 = vadd.f32 %v1903, %v2052
    %v2054 = vpop.f32.mrb[0].mxu0
    %v2055 = vpop.f32.mrb[0].mxu0
    %v2056 = vadd.f32 %v1903, %v2055
    %v2057 = vpop.f32.mrb[0].mxu0
    %2058 = vmatprep.mubr.bf16.mxu0 0
    %2059 = vmatmul.mubr.bf16.gmra.mrb[0].mxu0 %v1949
    %v2060 = vpop.f32.mrb[0].mxu0
    %v2061 = vadd.f32 %v1903, %v2060
    %v2062 = vpop.f32.mrb[0].mxu0
    %v2063 = vpop.f32.mrb[0].mxu0
    %v2064 = vadd.f32 %v1903, %v2063
    %v2065 = vpop.f32.mrb[0].mxu0
    %2066 = vmatprep.mubr.bf16.mxu0 0
    %2067 = vmatmul.mubr.bf16.gmra.mrb[0].mxu0 %v1952
    %v2068 = vpop.f32.mrb[0].mxu0
    %v2069 = vadd.f32 %v1903, %v2068
    %v2070 = vpop.f32.mrb[0].mxu0
    %v2071 = vpop.f32.mrb[0].mxu0
    %v2072 = vadd.f32 %v1903, %v2071
    %v2073 = vpop.f32.mrb[0].mxu0
    %2074 = vmatprep.mubr.bf16.mxu0 0
    %2075 = vmatmul.mubr.bf16.gmra.mrb[0].mxu0 %v1955
    %v2076 = vpop.f32.mrb[0].mxu0
    %v2077 = vadd.f32 %v1903, %v2076
    %v2078 = vpop.f32.mrb[0].mxu0
    %v2079 = vpop.f32.mrb[0].mxu0
    %v2080 = vadd.f32 %v1903, %v2079
    %v2081 = vpop.f32.mrb[0].mxu0
    %2082 = vmatprep.mubr.bf16.mxu0 0
    %2083 = vmatmul.mubr.bf16.gmra.mrb[0].mxu0 %v1958
    %v2084 = vpop.f32.mrb[0].mxu0
    %v2085 = vadd.f32 %v1903, %v2084
    %v2086 = vpop.f32.mrb[0].mxu0
    %v2087 = vpop.f32.mrb[0].mxu0
    %v2088 = vadd.f32 %v1903, %v2087
    %v2089 = vpop.f32.mrb[0].mxu0
    %2090 = vmatprep.mubr.bf16.mxu0 0
    %2091 = vmatmul.mubr.bf16.gmra.mrb[0].mxu0 %v1961
    %v2092 = vpop.f32.mrb[0].mxu0
    %v2093 = vadd.f32 %v1903, %v2092
    %v2094 = vpop.f32.mrb[0].mxu0
    %v2095 = vpop.f32.mrb[0].mxu0
    %v2096 = vadd.f32 %v1903, %v2095
    %v2097 = vpop.f32.mrb[0].mxu0
    %2098 = vmatprep.mubr.bf16.mxu0 0
    %2099 = vmatmul.mubr.bf16.gmra.mrb[0].mxu0 %v1964
    %v2100 = vpop.f32.mrb[0].mxu0
    %v2101 = vadd.f32 %v1903, %v2100
    %v2102 = vpop.f32.mrb[0].mxu0
    %v2103 = vpop.f32.mrb[0].mxu0
    %v2104 = vadd.f32 %v1903, %v2103
    %v2105 = vpop.f32.mrb[0].mxu0
    %2106 = vmatprep.mubr.bf16.mxu0 0
    %2107 = vmatmul.mubr.bf16.gmra.mrb[0].mxu0 %v1967
    %v2108 = vpop.f32.mrb[0].mxu0
    %v2109 = vadd.f32 %v1903, %v2108
    %v2110 = vpop.f32.mrb[0].mxu0
    %v2111 = vpop.f32.mrb[0].mxu0
    %v2112 = vadd.f32 %v1903, %v2111
    %v2113 = vpop.f32.mrb[0].mxu0
    %2114 = vmatprep.mubr.bf16.mxu0 0
    %2115 = vmatmul.mubr.bf16.gmra.mrb[0].mxu0 %v1970
    %v2116 = vpop.f32.mrb[0].mxu0
    %v2117 = vadd.f32 %v1903, %v2116
    %v2118 = vpop.f32.mrb[0].mxu0
    %v2119 = vpop.f32.mrb[0].mxu0
    %v2120 = vadd.f32 %v1903, %v2119
    %v2121 = vpop.f32.mrb[0].mxu0
    %2122 = vmatprep.mubr.bf16.mxu0 0
    %2123 = vmatmul.mubr.bf16.gmra.mrb[0].mxu0 %v1973
    %v2124 = vpop.f32.mrb[0].mxu0
    %v2125 = vadd.f32 %v1903, %v2124
    %v2126 = vpop.f32.mrb[0].mxu0
    %v2127 = vpop.f32.mrb[0].mxu0
    %v2128 = vadd.f32 %v1903, %v2127
    %v2129 = vpop.f32.mrb[0].mxu0
    %2130 = vmatprep.mubr.bf16.mxu0 0
    %2131 = vmatmul.mubr.bf16.gmra.mrb[0].mxu0 %v1976
    %v2132 = vpop.f32.mrb[0].mxu0
    %v2133 = vadd.f32 %v1903, %v2132
    %v2134 = vpop.f32.mrb[0].mxu0
    %v2135 = vpop.f32.mrb[0].mxu0
    %v2136 = vadd.f32 %v1903, %v2135
    %v2137 = vpop.f32.mrb[0].mxu0
    %2138 = vdwg.mxu0
    %v2139 = vmul.f32 %v2013, 0.2
    %v2140 = vmul.f32 %v2016, 0.2
    %v2141 = vmul.f32 %v2021, 0.2
    %v2142 = vmul.f32 %v2024, 0.2
    %v2143 = vmul.f32 %v2029, 0.2
    %v2144 = vmul.f32 %v2032, 0.2
    %v2145 = vmul.f32 %v2037, 0.2
    %v2146 = vmul.f32 %v2040, 0.2
    %v2147 = vmul.f32 %v2045, 0.2
    %v2148 = vmul.f32 %v2048, 0.2
    %v2149 = vmul.f32 %v2053, 0.2
    %v2150 = vmul.f32 %v2056, 0.2
    %v2151 = vmul.f32 %v2061, 0.2
    %v2152 = vmul.f32 %v2064, 0.2
    %v2153 = vmul.f32 %v2069, 0.2
    %v2154 = vmul.f32 %v2072, 0.2
    %v2155 = vmul.f32 %v2077, 0.2
    %v2156 = vmul.f32 %v2080, 0.2
    %v2157 = vmul.f32 %v2085, 0.2
    %v2158 = vmul.f32 %v2088, 0.2
    %v2159 = vmul.f32 %v2093, 0.2
    %v2160 = vmul.f32 %v2096, 0.2
    %v2161 = vmul.f32 %v2101, 0.2
    %v2162 = vmul.f32 %v2104, 0.2
    %v2163 = vmul.f32 %v2109, 0.2
    %v2164 = vmul.f32 %v2112, 0.2
    %v2165 = vmul.f32 %v2117, 0.2
    %v2166 = vmul.f32 %v2120, 0.2
    %v2167 = vmul.f32 %v2125, 0.2
    %v2168 = vmul.f32 %v2128, 0.2
    %v2169 = vmul.f32 %v2133, 0.2
    %v2170 = vmul.f32 %v2136, 0.2
    %v2171 = vmax.f32 %v2013, %v2139
    %v2172 = vmax.f32 %v2016, %v2140
    %v2173 = vmax.f32 %v2021, %v2141
    %v2174 = vmax.f32 %v2024, %v2142
    %v2175 = vmax.f32 %v2029, %v2143
    %v2176 = vmax.f32 %v2032, %v2144
    %v2177 = vmax.f32 %v2037, %v2145
    %v2178 = vmax.f32 %v2040, %v2146
    %v2179 = vmax.f32 %v2045, %v2147
    %v2180 = vmax.f32 %v2048, %v2148
    %v2181 = vmax.f32 %v2053, %v2149
    %v2182 = vmax.f32 %v2056, %v2150
    %v2183 = vmax.f32 %v2061, %v2151
    %v2184 = vmax.f32 %v2064, %v2152
    %v2185 = vmax.f32 %v2069, %v2153
    %v2186 = vmax.f32 %v2072, %v2154
    %v2187 = vmax.f32 %v2077, %v2155
    %v2188 = vmax.f32 %v2080, %v2156
    %v2189 = vmax.f32 %v2085, %v2157
    %v2190 = vmax.f32 %v2088, %v2158
    %v2191 = vmax.f32 %v2093, %v2159
    %v2192 = vmax.f32 %v2096, %v2160
    %v2193 = vmax.f32 %v2101, %v2161
    %v2194 = vmax.f32 %v2104, %v2162
    %v2195 = vmax.f32 %v2109, %v2163
    %v2196 = vmax.f32 %v2112, %v2164
    %v2197 = vmax.f32 %v2117, %v2165
    %v2198 = vmax.f32 %v2120, %v2166
    %v2199 = vmax.f32 %v2125, %v2167
    %v2200 = vmax.f32 %v2128, %v2168
    %v2201 = vmax.f32 %v2133, %v2169
    %v2202 = vmax.f32 %v2136, %v2170
    %v2203 = vld [vmem:[%s7] sm:$0x1]
    %v2204 = vunpack.c.l.bf16 %v2203
    %v2205 = vlaneseq
    %v2206 = vshrl.u32 %v2205, 7
    %v2207 = vsub.s32 0, %v2206
    %v2208 = vrot.slane %v2204, %v2207
    %v2209 = vmul.f32 %v2171, %v2208
    %v2210 = vmul.f32 %v2172, %v2208
    %v2211 = vmul.f32 %v2173, %v2208
    %v2212 = vmul.f32 %v2174, %v2208
    %v2213 = vmul.f32 %v2175, %v2208
    %v2214 = vmul.f32 %v2176, %v2208
    %v2215 = vmul.f32 %v2177, %v2208
    %v2216 = vmul.f32 %v2178, %v2208
    %v2217 = vmul.f32 %v2179, %v2208
    %v2218 = vmul.f32 %v2180, %v2208
    %v2219 = vmul.f32 %v2181, %v2208
    %v2220 = vmul.f32 %v2182, %v2208
    %v2221 = vmul.f32 %v2183, %v2208
    %v2222 = vmul.f32 %v2184, %v2208
    %v2223 = vmul.f32 %v2185, %v2208
    %v2224 = vmul.f32 %v2186, %v2208
    %v2225 = vmul.f32 %v2187, %v2208
    %v2226 = vmul.f32 %v2188, %v2208
    %v2227 = vmul.f32 %v2189, %v2208
    %v2228 = vmul.f32 %v2190, %v2208
    %v2229 = vmul.f32 %v2191, %v2208
    %v2230 = vmul.f32 %v2192, %v2208
    %v2231 = vmul.f32 %v2193, %v2208
    %v2232 = vmul.f32 %v2194, %v2208
    %v2233 = vmul.f32 %v2195, %v2208
    %v2234 = vmul.f32 %v2196, %v2208
    %v2235 = vmul.f32 %v2197, %v2208
    %v2236 = vmul.f32 %v2198, %v2208
    %v2237 = vmul.f32 %v2199, %v2208
    %v2238 = vmul.f32 %v2200, %v2208
    %v2239 = vmul.f32 %v2201, %v2208
    %v2240 = vmul.f32 %v2202, %v2208
    %vm2241 = vcmask 261120
    %v2242 = vsel %vm2241, %v2209, 0.0
    %2243 = vadd.xlane.f32.xlu0 %v2242
    %v2244 = vpop.xlane.xlu0 %2243
    %v2245 = vsel %vm2241, %v2210, 0.0
    %2246 = vadd.xlane.f32.xlu0 %v2245
    %v2247 = vpop.xlane.xlu0 %2246
    %v2248 = vsel %vm2241, %v2211, 0.0
    %2249 = vadd.xlane.f32.xlu0 %v2248
    %v2250 = vpop.xlane.xlu0 %2249
    %v2251 = vsel %vm2241, %v2212, 0.0
    %2252 = vadd.xlane.f32.xlu0 %v2251
    %v2253 = vpop.xlane.xlu0 %2252
    %v2254 = vsel %vm2241, %v2213, 0.0
    %2255 = vadd.xlane.f32.xlu0 %v2254
    %v2256 = vpop.xlane.xlu0 %2255
    %v2257 = vsel %vm2241, %v2214, 0.0
    %2258 = vadd.xlane.f32.xlu0 %v2257
    %v2259 = vpop.xlane.xlu0 %2258
    %v2260 = vsel %vm2241, %v2215, 0.0
    %2261 = vadd.xlane.f32.xlu0 %v2260
    %v2262 = vpop.xlane.xlu0 %2261
    %v2263 = vsel %vm2241, %v2216, 0.0
    %2264 = vadd.xlane.f32.xlu0 %v2263
    %v2265 = vpop.xlane.xlu0 %2264
    %v2266 = vsel %vm2241, %v2217, 0.0
    %2267 = vadd.xlane.f32.xlu0 %v2266
    %v2268 = vpop.xlane.xlu0 %2267
    %v2269 = vsel %vm2241, %v2218, 0.0
    %2270 = vadd.xlane.f32.xlu0 %v2269
    %v2271 = vpop.xlane.xlu0 %2270
    %v2272 = vsel %vm2241, %v2219, 0.0
    %2273 = vadd.xlane.f32.xlu0 %v2272
    %v2274 = vpop.xlane.xlu0 %2273
    %v2275 = vsel %vm2241, %v2220, 0.0
    %2276 = vadd.xlane.f32.xlu0 %v2275
    %v2277 = vpop.xlane.xlu0 %2276
    %v2278 = vsel %vm2241, %v2221, 0.0
    %2279 = vadd.xlane.f32.xlu0 %v2278
    %v2280 = vpop.xlane.xlu0 %2279
    %v2281 = vsel %vm2241, %v2222, 0.0
    %2282 = vadd.xlane.f32.xlu0 %v2281
    %v2283 = vpop.xlane.xlu0 %2282
    %v2284 = vsel %vm2241, %v2223, 0.0
    %2285 = vadd.xlane.f32.xlu0 %v2284
    %v2286 = vpop.xlane.xlu0 %2285
    %v2287 = vsel %vm2241, %v2224, 0.0
    %2288 = vadd.xlane.f32.xlu0 %v2287
    %v2289 = vpop.xlane.xlu0 %2288
    %v2290 = vsel %vm2241, %v2225, 0.0
    %2291 = vadd.xlane.f32.xlu0 %v2290
    %v2292 = vpop.xlane.xlu0 %2291
    %v2293 = vsel %vm2241, %v2226, 0.0
    %2294 = vadd.xlane.f32.xlu0 %v2293
    %v2295 = vpop.xlane.xlu0 %2294
    %v2296 = vsel %vm2241, %v2227, 0.0
    %2297 = vadd.xlane.f32.xlu0 %v2296
    %v2298 = vpop.xlane.xlu0 %2297
    %v2299 = vsel %vm2241, %v2228, 0.0
    %2300 = vadd.xlane.f32.xlu0 %v2299
    %v2301 = vpop.xlane.xlu0 %2300
    %v2302 = vsel %vm2241, %v2229, 0.0
    %2303 = vadd.xlane.f32.xlu0 %v2302
    %v2304 = vpop.xlane.xlu0 %2303
    %v2305 = vsel %vm2241, %v2230, 0.0
    %2306 = vadd.xlane.f32.xlu0 %v2305
    %v2307 = vpop.xlane.xlu0 %2306
    %v2308 = vsel %vm2241, %v2231, 0.0
    %2309 = vadd.xlane.f32.xlu0 %v2308
    %v2310 = vpop.xlane.xlu0 %2309
    %v2311 = vsel %vm2241, %v2232, 0.0
    %2312 = vadd.xlane.f32.xlu0 %v2311
    %v2313 = vpop.xlane.xlu0 %2312
    %v2314 = vsel %vm2241, %v2233, 0.0
    %2315 = vadd.xlane.f32.xlu0 %v2314
    %v2316 = vpop.xlane.xlu0 %2315
    %v2317 = vsel %vm2241, %v2234, 0.0
    %2318 = vadd.xlane.f32.xlu0 %v2317
    %v2319 = vpop.xlane.xlu0 %2318
    %v2320 = vsel %vm2241, %v2235, 0.0
    %2321 = vadd.xlane.f32.xlu0 %v2320
    %v2322 = vpop.xlane.xlu0 %2321
    %v2323 = vsel %vm2241, %v2236, 0.0
    %2324 = vadd.xlane.f32.xlu0 %v2323
    %v2325 = vpop.xlane.xlu0 %2324
    %v2326 = vsel %vm2241, %v2237, 0.0
    %2327 = vadd.xlane.f32.xlu0 %v2326
    %v2328 = vpop.xlane.xlu0 %2327
    %v2329 = vsel %vm2241, %v2238, 0.0
    %2330 = vadd.xlane.f32.xlu0 %v2329
    %v2331 = vpop.xlane.xlu0 %2330
    %v2332 = vsel %vm2241, %v2239, 0.0
    %2333 = vadd.xlane.f32.xlu0 %v2332
    %v2334 = vpop.xlane.xlu0 %2333
    %v2335 = vsel %vm2241, %v2240, 0.0
    %2336 = vadd.xlane.f32.xlu0 %v2335
    %v2337 = vpop.xlane.xlu0 %2336
    %v2338 = vld [vmem:[#allocation2] sm:$0x1]
    %v2340 = vlaneseq
    %v2341 = vshrl.u32 %v2340, 7
    %v2342 = vsub.s32 0, %v2341
    %v2343 = vrot.slane %v2338, %v2342
    %v2345 = vadd.f32 %v2244, %v2343
    %v2346 = vadd.f32 %v2247, %v2343
    %v2347 = vadd.f32 %v2250, %v2343
    %v2348 = vadd.f32 %v2253, %v2343
    %v2349 = vadd.f32 %v2256, %v2343
    %v2350 = vadd.f32 %v2259, %v2343
    %v2351 = vadd.f32 %v2262, %v2343
    %v2352 = vadd.f32 %v2265, %v2343
    %v2353 = vadd.f32 %v2268, %v2343
    %v2354 = vadd.f32 %v2271, %v2343
    %v2355 = vadd.f32 %v2274, %v2343
    %v2356 = vadd.f32 %v2277, %v2343
    %v2357 = vadd.f32 %v2280, %v2343
    %v2358 = vadd.f32 %v2283, %v2343
    %v2359 = vadd.f32 %v2286, %v2343
    %v2360 = vadd.f32 %v2289, %v2343
    %v2361 = vadd.f32 %v2292, %v2343
    %v2362 = vadd.f32 %v2295, %v2343
    %v2363 = vadd.f32 %v2298, %v2343
    %v2364 = vadd.f32 %v2301, %v2343
    %v2365 = vadd.f32 %v2304, %v2343
    %v2366 = vadd.f32 %v2307, %v2343
    %v2367 = vadd.f32 %v2310, %v2343
    %v2368 = vadd.f32 %v2313, %v2343
    %v2369 = vadd.f32 %v2316, %v2343
    %v2370 = vadd.f32 %v2319, %v2343
    %v2371 = vadd.f32 %v2322, %v2343
    %v2372 = vadd.f32 %v2325, %v2343
    %v2373 = vadd.f32 %v2328, %v2343
    %v2374 = vadd.f32 %v2331, %v2343
    %v2375 = vadd.f32 %v2334, %v2343
    %v2376 = vadd.f32 %v2337, %v2343
    %vm2377 = vcmask 7168
    %2378 = vst.msk [vmem:[%s9] sm:$0xff] %vm2377, %v2345
    %2379 = vst.msk [vmem:[%s9 + $0x8] sm:$0xff] %vm2377, %v2346
    %2380 = vst.msk [vmem:[%s9 + $0x10] sm:$0xff] %vm2377, %v2347
    %2381 = vst.msk [vmem:[%s9 + $0x18] sm:$0xff] %vm2377, %v2348
    %2382 = vst.msk [vmem:[%s9 + $0x20] sm:$0xff] %vm2377, %v2349
    %2383 = vst.msk [vmem:[%s9 + $0x28] sm:$0xff] %vm2377, %v2350
    %2384 = vst.msk [vmem:[%s9 + $0x30] sm:$0xff] %vm2377, %v2351
    %2385 = vst.msk [vmem:[%s9 + $0x38] sm:$0xff] %vm2377, %v2352
    %2386 = vst.msk [vmem:[%s9 + $0x40] sm:$0xff] %vm2377, %v2353
    %2387 = vst.msk [vmem:[%s9 + $0x48] sm:$0xff] %vm2377, %v2354
    %2388 = vst.msk [vmem:[%s9 + $0x50] sm:$0xff] %vm2377, %v2355
    %2389 = vst.msk [vmem:[%s9 + $0x58] sm:$0xff] %vm2377, %v2356
    %2390 = vst.msk [vmem:[%s9 + $0x60] sm:$0xff] %vm2377, %v2357
    %2391 = vst.msk [vmem:[%s9 + $0x68] sm:$0xff] %vm2377, %v2358
    %2392 = vst.msk [vmem:[%s9 + $0x70] sm:$0xff] %vm2377, %v2359
    %2393 = vst.msk [vmem:[%s9 + $0x78] sm:$0xff] %vm2377, %v2360
    %2394 = vst.msk [vmem:[%s9 + $0x80] sm:$0xff] %vm2377, %v2361
    %2395 = vst.msk [vmem:[%s9 + $0x88] sm:$0xff] %vm2377, %v2362
    %2396 = vst.msk [vmem:[%s9 + $0x90] sm:$0xff] %vm2377, %v2363
    %2397 = vst.msk [vmem:[%s9 + $0x98] sm:$0xff] %vm2377, %v2364
    %2398 = vst.msk [vmem:[%s9 + $0xa0] sm:$0xff] %vm2377, %v2365
    %2399 = vst.msk [vmem:[%s9 + $0xa8] sm:$0xff] %vm2377, %v2366
    %2400 = vst.msk [vmem:[%s9 + $0xb0] sm:$0xff] %vm2377, %v2367
    %2401 = vst.msk [vmem:[%s9 + $0xb8] sm:$0xff] %vm2377, %v2368
    %2402 = vst.msk [vmem:[%s9 + $0xc0] sm:$0xff] %vm2377, %v2369
    %2403 = vst.msk [vmem:[%s9 + $0xc8] sm:$0xff] %vm2377, %v2370
    %2404 = vst.msk [vmem:[%s9 + $0xd0] sm:$0xff] %vm2377, %v2371
    %2405 = vst.msk [vmem:[%s9 + $0xd8] sm:$0xff] %vm2377, %v2372
    %2406 = vst.msk [vmem:[%s9 + $0xe0] sm:$0xff] %vm2377, %v2373
    %2407 = vst.msk [vmem:[%s9 + $0xe8] sm:$0xff] %vm2377, %v2374
    %2408 = vst.msk [vmem:[%s9 + $0xf0] sm:$0xff] %vm2377, %v2375
    %2409 = vst.msk [vmem:[%s9 + $0xf8] sm:$0xff] %vm2377, %v2376
    // Predicated region
    $region46: #{tpu_custom_call.1} parent=1 // pred_check
      _
    $region47: #{tpu_custom_call.1} parent=1 // pred_check_branch
      %2411 = sbr.rel (0) target = $region49
    $region48: #{tpu_custom_call.1} parent=1 // pred_region
      _
    $region49: #{tpu_custom_call.1} parent=1 // pred_fallthru
      _
    // Predicated region
    $region50: #{tpu_custom_call.1} parent=1 // pred_check
      _
    $region51: #{tpu_custom_call.1} parent=1 // pred_check_branch
      %2413 = sbr.rel (0) target = $region53
    $region52: #{tpu_custom_call.1} parent=1 // pred_region
      _
    $region53: #{tpu_custom_call.1} parent=1 // pred_fallthru
      _
    %2414 = vsyncpa [#allocation4], 1
    %2415 = vsyncpa [#allocation6], 1

</llo_original>
